<compile_context>
chip_gen: v6e
topology: v6e:2x2x1
jax: 0.10.0
libtpu: 0.0.40
codegen_flags: <defaults>
</compile_context>

<pallas_src>
import jax
import jax.numpy as jnp
from jax.experimental import pallas as pl
from jax.experimental.pallas import tpu as pltpu

BN_EPS = 1e-5


def _round_up(v, m):
    return ((v + m - 1) // m) * m


def head_kernel(x_ref, w1_ref, b1_ref, w2_ref, b2_ref, w3_ref, b3_ref, o_ref):
    # grad_reverse is identity in the forward pass (gradient trick only).
    # TODO(synk): grad_reverse backward (negated gradient), training-mode
    # dropout and batch-statistics BN are not implemented — inference
    # semantics only (BN running stats folded into the Linears on the host).
    w_dtype = w1_ref.dtype
    x = x_ref[...].astype(w_dtype)  # no-op in f32 mode; vreg cast in bf16 mode

    # dense1 (+ folded BN1) + SiLU.  dropout: identity in eval mode.
    h = jnp.dot(x, w1_ref[...], preferred_element_type=jnp.float32) + b1_ref[...]
    h = h * jax.nn.sigmoid(h)          # SiLU in f32; sigmoid -> EUP, mul -> VPU

    # dense2 (+ folded BN2) + SiLU
    h2 = jnp.dot(h.astype(w_dtype), w2_ref[...],
                 preferred_element_type=jnp.float32) + b2_ref[...]
    h2 = h2 * jax.nn.sigmoid(h2)

    # dense3 (no BN/activation after, matching the PyTorch forward)
    out = jnp.dot(h2.astype(w_dtype), w3_ref[...],
                  preferred_element_type=jnp.float32) + b3_ref[...]
    o_ref[...] = out.astype(o_ref.dtype)


def fold_bn_params(params, mxu_dtype=jnp.float32):
    """Fold eval-mode BatchNorm into the preceding Linear weights.

    Call ONCE and reuse the result (hoisted out of the per-call path).
    Weights may be cast to bf16 for the MXU; biases stay f32 (elementwise path
    is strictly f32, which keeps v5e happy).
    """
    s1 = params["g1"] * jax.lax.rsqrt(params["v1"] + BN_EPS)        # (1, F)
    w1 = params["w1"] * s1                                          # scale output cols
    b1 = (params["b1"] - params["m1"]) * s1 + params["be1"]

    s2 = params["g2"] * jax.lax.rsqrt(params["v2"] + BN_EPS)
    w2 = params["w2"] * s2
    b2 = (params["b2"] - params["m2"]) * s2 + params["be2"]

    return dict(
        w1=w1.astype(mxu_dtype), b1=b1,
        w2=w2.astype(mxu_dtype), b2=b2,
        w3=params["w3"].astype(mxu_dtype), b3=params["b3"],
    )


def _choose_tile(n_rows, tile_batch):
    """Row-tile size: 8-aligned only; >= 2 grid steps when tiles can stay >= 256."""
    n8 = _round_up(n_rows, 8)
    tb = min(_round_up(max(tile_batch, 8), 8), n8)
    # v7x megacore: if the whole batch would be a single step but it is large
    # enough, split into two >= 256-row tiles so both TensorCores get work.
    if tb >= n8 and n8 >= 512:
        tb = _round_up((n8 + 1) // 2, 8)
    n_pad = _round_up(n8, tb)
    return tb, n_pad


def domain_classification_head(x, folded, *, tile_batch=1024):
    """x: (N, n_filters).  folded: output of fold_bn_params (called once)."""
    N, F = x.shape
    D = folded["w3"].shape[1]

    tb, n_pad = _choose_tile(N, tile_batch)

    # Only cheap row padding (sublane alignment); no feature padding.
    xp = x if n_pad == N else jnp.pad(x, ((0, n_pad - N), (0, 0)))

    def full_spec(arr):
        # Parameter blocks: full (small) array, resident every grid step.
        return pl.BlockSpec(arr.shape, lambda i: (0, 0))

    grid = (n_pad // tb,)
    out = pl.pallas_call(
        head_kernel,
        out_shape=jax.ShapeDtypeStruct((n_pad, D), jnp.float32),
        grid_spec=pltpu.PrefetchScalarGridSpec(
            num_scalar_prefetch=0,
            grid=grid,
            in_specs=[
                pl.BlockSpec((tb, F), lambda i: (i, 0)),   # x tile, unpadded lanes
                full_spec(folded["w1"]), full_spec(folded["b1"]),
                full_spec(folded["w2"]), full_spec(folded["b2"]),
                full_spec(folded["w3"]), full_spec(folded["b3"]),
            ],
            out_specs=pl.BlockSpec((tb, D), lambda i: (i, 0)),   # narrow output
        ),
        compiler_params=pltpu.CompilerParams(
            dimension_semantics=("parallel",),
        ),
    )(xp, folded["w1"], folded["b1"], folded["w2"], folded["b2"],
      folded["w3"], folded["b3"])

    return out if n_pad == N else out[:N]


def init_params(key, n_filters, n_domains):
    """Deterministic synthetic parameters matching the nn.Module shapes.

    Linear weights kept as (in, out) — transpose of PyTorch's (out, in).
    BatchNorm running stats: mean drawn small, var positive.
    Vectors stored as (1, F) for clean lane broadcasting.
    """
    ks = jax.random.split(key, 12)
    h2 = n_filters // 2

    def lin(kw, kb, fan_in, fan_out):
        bound = 1.0 / jnp.sqrt(fan_in)
        w = jax.random.uniform(kw, (fan_in, fan_out), jnp.float32, -bound, bound)
        b = jax.random.uniform(kb, (1, fan_out), jnp.float32, -bound, bound)
        return w, b

    w1, b1 = lin(ks[0], ks[1], n_filters, n_filters)
    w2, b2 = lin(ks[2], ks[3], n_filters, h2)
    w3, b3 = lin(ks[4], ks[5], h2, n_domains)

    def bn(kg, kb, km, feat):
        g = 1.0 + 0.05 * jax.random.normal(kg, (1, feat), jnp.float32)
        be = 0.05 * jax.random.normal(kb, (1, feat), jnp.float32)
        m = 0.1 * jax.random.normal(km, (1, feat), jnp.float32)
        v = jnp.ones((1, feat), jnp.float32) * 1.2
        return g, be, m, v

    g1, be1, m1, v1 = bn(ks[6], ks[7], ks[8], n_filters)
    g2, be2, m2, v2 = bn(ks[9], ks[10], ks[11], h2)

    return dict(
        w1=w1, b1=b1, g1=g1, be1=be1, m1=m1, v1=v1,
        w2=w2, b2=b2, g2=g2, be2=be2, m2=m2, v2=v2,
        w3=w3, b3=b3,
    )


def reference(x, p):
    """Pure-JAX reference with *unfolded* BatchNorm (checks the host folding too)."""
    def silu(h):
        return h * jax.nn.sigmoid(h)

    h = x @ p["w1"] + p["b1"]
    h = (h - p["m1"]) * jax.lax.rsqrt(p["v1"] + BN_EPS) * p["g1"] + p["be1"]
    h = silu(h)
    h = h @ p["w2"] + p["b2"]
    h = (h - p["m2"]) * jax.lax.rsqrt(p["v2"] + BN_EPS) * p["g2"] + p["be2"]
    h = silu(h)
    return h @ p["w3"] + p["b3"]


if __name__ == "__main__":
    n_filters = 32
    n_domains = 8
    batch = 1024            # splits into two 512-row tiles -> 2-step parallel grid

    key = jax.random.PRNGKey(0)
    kx, kp = jax.random.split(key)
    x = jax.random.normal(kx, (batch, n_filters), jnp.float32)
    params = init_params(kp, n_filters, n_domains)
    ref = reference(x, params)

    head = jax.jit(lambda xi, fp: domain_classification_head(xi, fp, tile_batch=1024))

    # f32 MXU inputs: exact match with the f32 module semantics.
    folded_f32 = fold_bn_params(params)                     # hoisted: fold once
    out = jax.block_until_ready(head(x, folded_f32))
    assert out.shape == (batch, n_domains)
    assert jnp.allclose(out, ref, atol=1e-4, rtol=1e-4), "f32 mismatch vs reference"

    # bf16 MXU inputs (v6e/v7x recommendation; f32 accumulation + f32 elementwise).
    folded_bf16 = fold_bn_params(params, mxu_dtype=jnp.bfloat16)
    out_bf16 = jax.block_until_ready(head(x.astype(jnp.bfloat16), folded_bf16))
    assert out_bf16.shape == (batch, n_domains)
    assert jnp.allclose(out_bf16, ref, atol=1e-1, rtol=1e-1), "bf16 mismatch vs reference"

    print("KERNEL_OK")
</pallas_src>

<mosaic_0001>
module attributes {stable_mosaic.version = 11 : i64} {
  func.func @head_kernel(%arg0: i32, %arg1: memref<512x32xf32, #tpu.memory_space<vmem>>, %arg2: memref<32x32xf32, #tpu.memory_space<vmem>>, %arg3: memref<1x32xf32, #tpu.memory_space<vmem>>, %arg4: memref<32x16xf32, #tpu.memory_space<vmem>>, %arg5: memref<1x16xf32, #tpu.memory_space<vmem>>, %arg6: memref<16x8xf32, #tpu.memory_space<vmem>>, %arg7: memref<1x8xf32, #tpu.memory_space<vmem>>, %arg8: memref<512x8xf32, #tpu.memory_space<vmem>>) attributes {dimension_semantics = [#tpu.dimension_semantics<parallel>], iteration_bounds = array<i64: 2>, scalar_prefetch = 0 : i64, scratch_operands = 0 : i64, tpu.core_type = #tpu.core_type<tc>, window_params = [{transform_indices = @transform_0, window_bounds = array<i64: 512, 32>}, {pipeline_mode = #tpu.pipeline_mode<synchronous>, transform_indices = @transform_1, window_bounds = array<i64: 32, 32>}, {pipeline_mode = #tpu.pipeline_mode<synchronous>, transform_indices = @transform_2, window_bounds = array<i64: 1, 32>}, {pipeline_mode = #tpu.pipeline_mode<synchronous>, transform_indices = @transform_3, window_bounds = array<i64: 32, 16>}, {pipeline_mode = #tpu.pipeline_mode<synchronous>, transform_indices = @transform_4, window_bounds = array<i64: 1, 16>}, {pipeline_mode = #tpu.pipeline_mode<synchronous>, transform_indices = @transform_5, window_bounds = array<i64: 16, 8>}, {pipeline_mode = #tpu.pipeline_mode<synchronous>, transform_indices = @transform_6, window_bounds = array<i64: 1, 8>}, {transform_indices = @transform_7, window_bounds = array<i64: 512, 8>}]} {
    %c0 = arith.constant 0 : index
    %c0_0 = arith.constant 0 : index
    %0 = vector.load %arg1[%c0, %c0_0] : memref<512x32xf32, #tpu.memory_space<vmem>>, vector<512x32xf32>
    %c0_1 = arith.constant 0 : index
    %c0_2 = arith.constant 0 : index
    %1 = vector.load %arg2[%c0_1, %c0_2] : memref<32x32xf32, #tpu.memory_space<vmem>>, vector<32x32xf32>
    %cst = arith.constant dense<0.000000e+00> : vector<512x32xf32>
    %2 = tpu.matmul %0, %1, %cst {dimension_numbers = #tpu.dot_dimension_numbers<[1], [0], [0], [1], [0, 0, 1, 1], [], []>} : vector<512x32xf32>, vector<32x32xf32>, vector<512x32xf32> -> vector<512x32xf32>
    %c0_3 = arith.constant 0 : index
    %c0_4 = arith.constant 0 : index
    %3 = vector.load %arg3[%c0_3, %c0_4] : memref<1x32xf32, #tpu.memory_space<vmem>>, vector<1x32xf32>
    %4 = vector.broadcast %3 : vector<1x32xf32> to vector<512x32xf32>
    %5 = arith.addf %2, %4 : vector<512x32xf32>
    %6 = arith.negf %5 : vector<512x32xf32>
    %7 = math.exp %6 : vector<512x32xf32>
    %cst_5 = arith.constant 1.000000e+00 : f32
    %8 = vector.broadcast %cst_5 : f32 to vector<512x32xf32>
    %9 = arith.addf %8, %7 : vector<512x32xf32>
    %10 = arith.divf %8, %9 : vector<512x32xf32>
    %11 = arith.mulf %5, %10 : vector<512x32xf32>
    %c0_6 = arith.constant 0 : index
    %c0_7 = arith.constant 0 : index
    %12 = vector.load %arg4[%c0_6, %c0_7] : memref<32x16xf32, #tpu.memory_space<vmem>>, vector<32x16xf32>
    %cst_8 = arith.constant dense<0.000000e+00> : vector<512x16xf32>
    %13 = tpu.matmul %11, %12, %cst_8 {dimension_numbers = #tpu.dot_dimension_numbers<[1], [0], [0], [1], [0, 0, 1, 1], [], []>} : vector<512x32xf32>, vector<32x16xf32>, vector<512x16xf32> -> vector<512x16xf32>
    %c0_9 = arith.constant 0 : index
    %c0_10 = arith.constant 0 : index
    %14 = vector.load %arg5[%c0_9, %c0_10] : memref<1x16xf32, #tpu.memory_space<vmem>>, vector<1x16xf32>
    %15 = vector.broadcast %14 : vector<1x16xf32> to vector<512x16xf32>
    %16 = arith.addf %13, %15 : vector<512x16xf32>
    %17 = arith.negf %16 : vector<512x16xf32>
    %18 = math.exp %17 : vector<512x16xf32>
    %cst_11 = arith.constant 1.000000e+00 : f32
    %19 = vector.broadcast %cst_11 : f32 to vector<512x16xf32>
    %20 = arith.addf %19, %18 : vector<512x16xf32>
    %21 = arith.divf %19, %20 : vector<512x16xf32>
    %22 = arith.mulf %16, %21 : vector<512x16xf32>
    %c0_12 = arith.constant 0 : index
    %c0_13 = arith.constant 0 : index
    %23 = vector.load %arg6[%c0_12, %c0_13] : memref<16x8xf32, #tpu.memory_space<vmem>>, vector<16x8xf32>
    %cst_14 = arith.constant dense<0.000000e+00> : vector<512x8xf32>
    %24 = tpu.matmul %22, %23, %cst_14 {dimension_numbers = #tpu.dot_dimension_numbers<[1], [0], [0], [1], [0, 0, 1, 1], [], []>} : vector<512x16xf32>, vector<16x8xf32>, vector<512x8xf32> -> vector<512x8xf32>
    %c0_15 = arith.constant 0 : index
    %c0_16 = arith.constant 0 : index
    %25 = vector.load %arg7[%c0_15, %c0_16] : memref<1x8xf32, #tpu.memory_space<vmem>>, vector<1x8xf32>
    %26 = vector.broadcast %25 : vector<1x8xf32> to vector<512x8xf32>
    %27 = arith.addf %24, %26 : vector<512x8xf32>
    %c0_17 = arith.constant 0 : index
    %c0_18 = arith.constant 0 : index
    %28 = vector.load %arg8[%c0_17, %c0_18] : memref<512x8xf32, #tpu.memory_space<vmem>>, vector<512x8xf32>
    tpu.vector_store %arg8[%c0_17, %c0_18], %27 {strides = array<i32>} : memref<512x8xf32, #tpu.memory_space<vmem>>, vector<512x8xf32>,
    return
  }
  func.func @transform_0(%arg0: i32) -> (i32, i32) {
    %c0_i32 = arith.constant 0 : i32
    %c0_i32_0 = arith.constant 0 : i32
    return %arg0, %c0_i32 : i32, i32
  }
  func.func @transform_1(%arg0: i32) -> (i32, i32) {
    %c0_i32 = arith.constant 0 : i32
    %c0_i32_0 = arith.constant 0 : i32
    %c0_i32_1 = arith.constant 0 : i32
    return %c0_i32, %c0_i32_0 : i32, i32
  }
  func.func @transform_2(%arg0: i32) -> (i32, i32) {
    %c0_i32 = arith.constant 0 : i32
    %c0_i32_0 = arith.constant 0 : i32
    %c0_i32_1 = arith.constant 0 : i32
    return %c0_i32, %c0_i32_0 : i32, i32
  }
  func.func @transform_3(%arg0: i32) -> (i32, i32) {
    %c0_i32 = arith.constant 0 : i32
    %c0_i32_0 = arith.constant 0 : i32
    %c0_i32_1 = arith.constant 0 : i32
    return %c0_i32, %c0_i32_0 : i32, i32
  }
  func.func @transform_4(%arg0: i32) -> (i32, i32) {
    %c0_i32 = arith.constant 0 : i32
    %c0_i32_0 = arith.constant 0 : i32
    %c0_i32_1 = arith.constant 0 : i32
    return %c0_i32, %c0_i32_0 : i32, i32
  }
  func.func @transform_5(%arg0: i32) -> (i32, i32) {
    %c0_i32 = arith.constant 0 : i32
    %c0_i32_0 = arith.constant 0 : i32
    %c0_i32_1 = arith.constant 0 : i32
    return %c0_i32, %c0_i32_0 : i32, i32
  }
  func.func @transform_6(%arg0: i32) -> (i32, i32) {
    %c0_i32 = arith.constant 0 : i32
    %c0_i32_0 = arith.constant 0 : i32
    %c0_i32_1 = arith.constant 0 : i32
    return %c0_i32, %c0_i32_0 : i32, i32
  }
  func.func @transform_7(%arg0: i32) -> (i32, i32) {
    %c0_i32 = arith.constant 0 : i32
    %c0_i32_0 = arith.constant 0 : i32
    return %arg0, %c0_i32 : i32, i32
  }
}

</mosaic_0001>

<llo_original>
// kernel: _lambda_.1
$region0: #{_lambda_.1}
  #allocation0 [shape = 'u32[]', space=smem, size = 0x4, offset = 0x4, fixed_abs, tag = 'smem constant byte address 0x4 - core index']
  #allocation1 [shape = 'u32[144,128]{1,0:T(1,128)}', space=vmem, size = 0x12000, scoped, tag = 'internal scratch']
  %s0 = inlined_call_operand.vmem [shape: f32[1024,32], index: 0, kind: input, shape index: {}]
  %s1 = inlined_call_operand.vmem [shape: f32[32,32], index: 1, kind: input, shape index: {}]
  %s2 = inlined_call_operand.vmem [shape: f32[1,32], index: 2, kind: input, shape index: {}]
  %s3 = inlined_call_operand.vmem [shape: f32[32,16], index: 3, kind: input, shape index: {}]
  %s4 = inlined_call_operand.vmem [shape: f32[1,16], index: 4, kind: input, shape index: {}]
  %s5 = inlined_call_operand.vmem [shape: f32[16,8], index: 5, kind: input, shape index: {}]
  %s6 = inlined_call_operand.vmem [shape: f32[1,8], index: 6, kind: input, shape index: {}]
  %s7 = inlined_call_operand.vmem [shape: f32[1024,8], index: 7, kind: output, shape index: {}]
  %s8 = sld [smem:[#allocation0]]
  $region61: #{_lambda_.1} parent=0
    _
  %s10 = ssub.s32 1, %s8
  %s11 = scalar_select 0, %s10, %s8
  loop: start=0, step=1, limit=4
  $region2: #{_lambda_.1} parent=0 // loop_pre_header
    _
  $region3: #{_lambda_.1} parent=0 // loop_header
    %s13 = sphi 0, %s17
    %p14 = scmp.ge.s32.totalorder %s13, 4
    %s23 = sphi 0, %s25
    %s26 = sphi 0, %s23
    %s27 = sphi 0, %s26
    %s43 = sphi 0, %s27
    %s47 = sphi 0, %s47
    %s49 = sphi 0, %s47
    %s50 = sphi 0, %s49
    %s64 = sphi 0, %s50
    %s68 = sphi 0, %s68
    %s70 = sphi 0, %s68
    %s71 = sphi 0, %s70
    %s85 = sphi 0, %s71
    %s89 = sphi 0, %s89
    %s91 = sphi 0, %s89
    %s92 = sphi 0, %s91
    %s106 = sphi 0, %s92
    %s110 = sphi 0, %s110
    %s112 = sphi 0, %s110
    %s113 = sphi 0, %s112
    %s127 = sphi 0, %s113
    %s131 = sphi 0, %s131
    %s133 = sphi 0, %s131
    %s134 = sphi 0, %s133
    %s148 = sphi 0, %s134
    %s152 = sphi 0, %s152
    %s154 = sphi 0, %s152
    %s155 = sphi 0, %s154
    %s169 = sphi 0, %s155
    %s175 = sphi 0, %s177
    %s178 = sphi 0, %s175
    %s179 = sphi 0, %s178
    %s195 = sphi 0, %s179
  $region4: #{_lambda_.1} parent=0 // loop_header_branch
    %16 = sbr.rel (%p14) target = $region8
  $region5: #{_lambda_.1} parent=0 // loop_body
    %s18 = ssub.s32 %s13, 1
    %s19 = ssub.s32 %s13, 2
    %s20 = sadd.s32 %s13, 1
    %s21 = ssub.s32 %s13, %s20
    %p22 = scmp.eq.s32.totalorder %s21, 0
    %s24 = sadd.s32 %s23, 1
    %s25 = scalar_select %p22, %s23, %s24
    %p28 = pneg %p22
    %p29 = scmp.eq.s32.totalorder %s13, 1
    %p30 = por %p28, %p29
    %p31 = scmp.ne.s32.totalorder %s23, %s26
    %p32 = scmp.eq.s32.totalorder %s13, 0
    %p33 = por %p31, %p32
    %p34 = scmp.ne.s32.totalorder %s23, %s26
    %p35 = scmp.eq.s32.totalorder %s18, 1
    %p36 = por %p34, %p35
    %p37 = scmp.ne.s32.totalorder %s26, %s27
    %p38 = scmp.eq.s32.totalorder %s18, 0
    %p39 = por %p37, %p38
    %p40 = scmp.ne.s32.totalorder %s26, %s27
    %p41 = scmp.eq.s32.totalorder %s19, 1
    %p42 = por %p40, %p41
    %p44 = scmp.ne.s32.totalorder %s27, %s43
    %p45 = scmp.eq.s32.totalorder %s19, 0
    %p46 = por %p44, %p45
    %s48 = sadd.s32 %s47, 1
    %p51 = scmp.eq.s32.totalorder %s13, 1
    %p52 = scmp.ne.s32.totalorder %s47, %s49
    %p53 = scmp.eq.s32.totalorder %s13, 0
    %p54 = por %p52, %p53
    %p55 = scmp.ne.s32.totalorder %s47, %s49
    %p56 = scmp.eq.s32.totalorder %s18, 1
    %p57 = por %p55, %p56
    %p58 = scmp.ne.s32.totalorder %s49, %s50
    %p59 = scmp.eq.s32.totalorder %s18, 0
    %p60 = por %p58, %p59
    %p61 = scmp.ne.s32.totalorder %s49, %s50
    %p62 = scmp.eq.s32.totalorder %s19, 1
    %p63 = por %p61, %p62
    %p65 = scmp.ne.s32.totalorder %s50, %s64
    %p66 = scmp.eq.s32.totalorder %s19, 0
    %p67 = por %p65, %p66
    %s69 = sadd.s32 %s68, 1
    %p72 = scmp.eq.s32.totalorder %s13, 1
    %p73 = scmp.ne.s32.totalorder %s68, %s70
    %p74 = scmp.eq.s32.totalorder %s13, 0
    %p75 = por %p73, %p74
    %p76 = scmp.ne.s32.totalorder %s68, %s70
    %p77 = scmp.eq.s32.totalorder %s18, 1
    %p78 = por %p76, %p77
    %p79 = scmp.ne.s32.totalorder %s70, %s71
    %p80 = scmp.eq.s32.totalorder %s18, 0
    %p81 = por %p79, %p80
    %p82 = scmp.ne.s32.totalorder %s70, %s71
    %p83 = scmp.eq.s32.totalorder %s19, 1
    %p84 = por %p82, %p83
    %p86 = scmp.ne.s32.totalorder %s71, %s85
    %p87 = scmp.eq.s32.totalorder %s19, 0
    %p88 = por %p86, %p87
    %s90 = sadd.s32 %s89, 1
    %p93 = scmp.eq.s32.totalorder %s13, 1
    %p94 = scmp.ne.s32.totalorder %s89, %s91
    %p95 = scmp.eq.s32.totalorder %s13, 0
    %p96 = por %p94, %p95
    %p97 = scmp.ne.s32.totalorder %s89, %s91
    %p98 = scmp.eq.s32.totalorder %s18, 1
    %p99 = por %p97, %p98
    %p100 = scmp.ne.s32.totalorder %s91, %s92
    %p101 = scmp.eq.s32.totalorder %s18, 0
    %p102 = por %p100, %p101
    %p103 = scmp.ne.s32.totalorder %s91, %s92
    %p104 = scmp.eq.s32.totalorder %s19, 1
    %p105 = por %p103, %p104
    %p107 = scmp.ne.s32.totalorder %s92, %s106
    %p108 = scmp.eq.s32.totalorder %s19, 0
    %p109 = por %p107, %p108
    %s111 = sadd.s32 %s110, 1
    %p114 = scmp.eq.s32.totalorder %s13, 1
    %p115 = scmp.ne.s32.totalorder %s110, %s112
    %p116 = scmp.eq.s32.totalorder %s13, 0
    %p117 = por %p115, %p116
    %p118 = scmp.ne.s32.totalorder %s110, %s112
    %p119 = scmp.eq.s32.totalorder %s18, 1
    %p120 = por %p118, %p119
    %p121 = scmp.ne.s32.totalorder %s112, %s113
    %p122 = scmp.eq.s32.totalorder %s18, 0
    %p123 = por %p121, %p122
    %p124 = scmp.ne.s32.totalorder %s112, %s113
    %p125 = scmp.eq.s32.totalorder %s19, 1
    %p126 = por %p124, %p125
    %p128 = scmp.ne.s32.totalorder %s113, %s127
    %p129 = scmp.eq.s32.totalorder %s19, 0
    %p130 = por %p128, %p129
    %s132 = sadd.s32 %s131, 1
    %p135 = scmp.eq.s32.totalorder %s13, 1
    %p136 = scmp.ne.s32.totalorder %s131, %s133
    %p137 = scmp.eq.s32.totalorder %s13, 0
    %p138 = por %p136, %p137
    %p139 = scmp.ne.s32.totalorder %s131, %s133
    %p140 = scmp.eq.s32.totalorder %s18, 1
    %p141 = por %p139, %p140
    %p142 = scmp.ne.s32.totalorder %s133, %s134
    %p143 = scmp.eq.s32.totalorder %s18, 0
    %p144 = por %p142, %p143
    %p145 = scmp.ne.s32.totalorder %s133, %s134
    %p146 = scmp.eq.s32.totalorder %s19, 1
    %p147 = por %p145, %p146
    %p149 = scmp.ne.s32.totalorder %s134, %s148
    %p150 = scmp.eq.s32.totalorder %s19, 0
    %p151 = por %p149, %p150
    %s153 = sadd.s32 %s152, 1
    %p156 = scmp.eq.s32.totalorder %s13, 1
    %p157 = scmp.ne.s32.totalorder %s152, %s154
    %p158 = scmp.eq.s32.totalorder %s13, 0
    %p159 = por %p157, %p158
    %p160 = scmp.ne.s32.totalorder %s152, %s154
    %p161 = scmp.eq.s32.totalorder %s18, 1
    %p162 = por %p160, %p161
    %p163 = scmp.ne.s32.totalorder %s154, %s155
    %p164 = scmp.eq.s32.totalorder %s18, 0
    %p165 = por %p163, %p164
    %p166 = scmp.ne.s32.totalorder %s154, %s155
    %p167 = scmp.eq.s32.totalorder %s19, 1
    %p168 = por %p166, %p167
    %p170 = scmp.ne.s32.totalorder %s155, %s169
    %p171 = scmp.eq.s32.totalorder %s19, 0
    %p172 = por %p170, %p171
    %s173 = ssub.s32 %s13, %s20
    %p174 = scmp.eq.s32.totalorder %s173, 0
    %s176 = sadd.s32 %s175, 1
    %s177 = scalar_select %p174, %s175, %s176
    %p180 = pneg %p174
    %p181 = scmp.eq.s32.totalorder %s13, 1
    %p182 = por %p180, %p181
    %p183 = scmp.ne.s32.totalorder %s175, %s178
    %p184 = scmp.eq.s32.totalorder %s13, 0
    %p185 = por %p183, %p184
    %p186 = scmp.ne.s32.totalorder %s175, %s178
    %p187 = scmp.eq.s32.totalorder %s18, 1
    %p188 = por %p186, %p187
    %p189 = scmp.ne.s32.totalorder %s178, %s179
    %p190 = scmp.eq.s32.totalorder %s18, 0
    %p191 = por %p189, %p190
    %p192 = scmp.ne.s32.totalorder %s178, %s179
    %p193 = scmp.eq.s32.totalorder %s19, 1
    %p194 = por %p192, %p193
    %p196 = scmp.ne.s32.totalorder %s179, %s195
    %p197 = scmp.eq.s32.totalorder %s19, 0
    %p198 = por %p196, %p197
    %p199 = scmp.le.s32.totalorder 1, %s13
    %p200 = scmp.lt.s32.totalorder %s13, 3
    %p201 = pnand %p199, %p200
    %p202 = pneg %p201
    // Predicated region
    $region9: #{_lambda_.1} parent=5 // pred_check
      _
    $region10: #{_lambda_.1} parent=5 // pred_check_branch
      %204 = sbr.rel (%p201) target = $region12
    $region11: #{_lambda_.1} parent=5 // pred_region
      %s205 = ssub.s32 %s13, 1
      // Predicated region
      $region13: #{_lambda_.1} parent=11 // pred_check
        %p206 = pneg %p60
      $region14: #{_lambda_.1} parent=11 // pred_check_branch
        %208 = sbr.rel (%p206) target = $region16
      $region15: #{_lambda_.1} parent=11 // pred_region
        _
      $region16: #{_lambda_.1} parent=11 // pred_fallthru
        _
      // Predicated region
      $region17: #{_lambda_.1} parent=11 // pred_check
        %p209 = pneg %p81
      $region18: #{_lambda_.1} parent=11 // pred_check_branch
        %211 = sbr.rel (%p209) target = $region20
      $region19: #{_lambda_.1} parent=11 // pred_region
        _
      $region20: #{_lambda_.1} parent=11 // pred_fallthru
        _
      // Predicated region
      $region21: #{_lambda_.1} parent=11 // pred_check
        %p212 = pneg %p102
      $region22: #{_lambda_.1} parent=11 // pred_check_branch
        %214 = sbr.rel (%p212) target = $region24
      $region23: #{_lambda_.1} parent=11 // pred_region
        _
      $region24: #{_lambda_.1} parent=11 // pred_fallthru
        _
      // Predicated region
      $region25: #{_lambda_.1} parent=11 // pred_check
        %p215 = pneg %p123
      $region26: #{_lambda_.1} parent=11 // pred_check_branch
        %217 = sbr.rel (%p215) target = $region28
      $region27: #{_lambda_.1} parent=11 // pred_region
        _
      $region28: #{_lambda_.1} parent=11 // pred_fallthru
        _
      // Predicated region
      $region29: #{_lambda_.1} parent=11 // pred_check
        %p218 = pneg %p144
      $region30: #{_lambda_.1} parent=11 // pred_check_branch
        %220 = sbr.rel (%p218) target = $region32
      $region31: #{_lambda_.1} parent=11 // pred_region
        _
      $region32: #{_lambda_.1} parent=11 // pred_fallthru
        _
      // Predicated region
      $region33: #{_lambda_.1} parent=11 // pred_check
        %p221 = pneg %p165
      $region34: #{_lambda_.1} parent=11 // pred_check_branch
        %223 = sbr.rel (%p221) target = $region36
      $region35: #{_lambda_.1} parent=11 // pred_region
        _
      $region36: #{_lambda_.1} parent=11 // pred_fallthru
        _
    $region12: #{_lambda_.1} parent=5 // pred_fallthru
      _
    %p224 = scmp.lt.s32.totalorder %s13, 2
    // Predicated region
    $region37: #{_lambda_.1} parent=5 // pred_check
      %p225 = pneg %p224
    $region38: #{_lambda_.1} parent=5 // pred_check_branch
      %227 = sbr.rel (%p225) target = $region40
    $region39: #{_lambda_.1} parent=5 // pred_region
      // Predicated region
      $region41: #{_lambda_.1} parent=39 // pred_check
        %p228 = pneg %p33
      $region42: #{_lambda_.1} parent=39 // pred_check_branch
        %230 = sbr.rel (%p228) target = $region44
      $region43: #{_lambda_.1} parent=39 // pred_region
        %s231 = smul.u32 64, %s13
        %p232 = scmp.lt.s32.totalorder %s231, 127
        %s233 = scalar_select %p232, %s231, 127
        %s234 = smul.addr %s233, 8
        %s235 = scalar_lea.vmem %s0, %s234
        %s236 = smul.u32 64, %s13
      $region44: #{_lambda_.1} parent=39 // pred_fallthru
        _
    $region40: #{_lambda_.1} parent=5 // pred_fallthru
      _
    %p237 = scmp.le.s32.totalorder 1, %s13
    %p238 = scmp.lt.s32.totalorder %s13, 3
    %p239 = pnand %p237, %p238
    %p240 = pneg %p239
    // Predicated region
    $region45: #{_lambda_.1} parent=5 // pred_check
      _
    $region46: #{_lambda_.1} parent=5 // pred_check_branch
      %242 = sbr.rel (%p239) target = $region48
    $region47: #{_lambda_.1} parent=5 // pred_region
      %s243 = ssub.s32 %s13, 1
      %s244 = smul.u32 64, %s18
      %p245 = scmp.lt.s32.totalorder %s244, 127
      %s246 = scalar_select %p245, %s244, 127
      %s247 = smul.addr %s246, 8
      %s248 = scalar_lea.vmem %s0, %s247
      %p249 = pneg %p39
      %p250 = pneg %p36
      %p251 = pneg %p60
      %p252 = pneg %p57
      %p253 = pneg %p81
      %p254 = pneg %p78
      %p255 = pneg %p102
      %p256 = pneg %p99
      %p257 = pneg %p123
      %p258 = pneg %p120
      %p259 = pneg %p144
      %p260 = pneg %p141
      %p261 = pneg %p165
      %p262 = pneg %p162
      %p263 = pneg %p191
      %p264 = pneg %p188
      %s265 = smul.u32 64, %s18
      %p266 = scmp.lt.s32.totalorder %s265, 127
      %s267 = scalar_select %p266, %s265, 127
      %s268 = smul.addr %s267, 8
      %s269 = scalar_lea.vmem %s7, %s268
      %s270 = smul.u32 64, %s18
      %p271 = scmp.lt.s32.totalorder %s270, 127
      %s272 = scalar_select %p271, %s270, 127
      %s273 = smul.addr %s272, 8
      %s274 = scalar_lea.vmem %s0, %s273
      %s275 = smul.u32 64, %s18
      %s276 = smul.u32 64, %s18
      %p277 = scmp.lt.s32.totalorder %s276, 127
      %s278 = scalar_select %p277, %s276, 127
      %s279 = smul.addr %s278, 8
      %s280 = scalar_lea.vmem %s7, %s279
      %s281 = smul.u32 64, %s18
      %v282 = vld [vmem:[%s274] sm:$0xff]
      %v283 = vld [vmem:[%s274 + $0x8] sm:$0xff]
      %v284 = vld [vmem:[%s274 + $0x10] sm:$0xff]
      %v285 = vld [vmem:[%s274 + $0x18] sm:$0xff]
      %v286 = vld [vmem:[%s274 + $0x20] sm:$0xff]
      %v287 = vld [vmem:[%s274 + $0x28] sm:$0xff]
      %v288 = vld [vmem:[%s274 + $0x30] sm:$0xff]
      %v289 = vld [vmem:[%s274 + $0x38] sm:$0xff]
      %v290 = vld [vmem:[%s274 + $0x40] sm:$0xff]
      %v291 = vld [vmem:[%s274 + $0x48] sm:$0xff]
      %v292 = vld [vmem:[%s274 + $0x50] sm:$0xff]
      %v293 = vld [vmem:[%s274 + $0x58] sm:$0xff]
      %v294 = vld [vmem:[%s274 + $0x60] sm:$0xff]
      %v295 = vld [vmem:[%s274 + $0x68] sm:$0xff]
      %v296 = vld [vmem:[%s274 + $0x70] sm:$0xff]
      %v297 = vld [vmem:[%s274 + $0x78] sm:$0xff]
      %v298 = vld [vmem:[%s274 + $0x80] sm:$0xff]
      %v299 = vld [vmem:[%s274 + $0x88] sm:$0xff]
      %v300 = vld [vmem:[%s274 + $0x90] sm:$0xff]
      %v301 = vld [vmem:[%s274 + $0x98] sm:$0xff]
      %v302 = vld [vmem:[%s274 + $0xa0] sm:$0xff]
      %v303 = vld [vmem:[%s274 + $0xa8] sm:$0xff]
      %v304 = vld [vmem:[%s274 + $0xb0] sm:$0xff]
      %v305 = vld [vmem:[%s274 + $0xb8] sm:$0xff]
      %v306 = vld [vmem:[%s274 + $0xc0] sm:$0xff]
      %v307 = vld [vmem:[%s274 + $0xc8] sm:$0xff]
      %v308 = vld [vmem:[%s274 + $0xd0] sm:$0xff]
      %v309 = vld [vmem:[%s274 + $0xd8] sm:$0xff]
      %v310 = vld [vmem:[%s274 + $0xe0] sm:$0xff]
      %v311 = vld [vmem:[%s274 + $0xe8] sm:$0xff]
      %v312 = vld [vmem:[%s274 + $0xf0] sm:$0xff]
      %v313 = vld [vmem:[%s274 + $0xf8] sm:$0xff]
      %v314 = vld [vmem:[%s274 + $0x100] sm:$0xff]
      %v315 = vld [vmem:[%s274 + $0x108] sm:$0xff]
      %v316 = vld [vmem:[%s274 + $0x110] sm:$0xff]
      %v317 = vld [vmem:[%s274 + $0x118] sm:$0xff]
      %v318 = vld [vmem:[%s274 + $0x120] sm:$0xff]
      %v319 = vld [vmem:[%s274 + $0x128] sm:$0xff]
      %v320 = vld [vmem:[%s274 + $0x130] sm:$0xff]
      %v321 = vld [vmem:[%s274 + $0x138] sm:$0xff]
      %v322 = vld [vmem:[%s274 + $0x140] sm:$0xff]
      %v323 = vld [vmem:[%s274 + $0x148] sm:$0xff]
      %v324 = vld [vmem:[%s274 + $0x150] sm:$0xff]
      %v325 = vld [vmem:[%s274 + $0x158] sm:$0xff]
      %v326 = vld [vmem:[%s274 + $0x160] sm:$0xff]
      %v327 = vld [vmem:[%s274 + $0x168] sm:$0xff]
      %v328 = vld [vmem:[%s274 + $0x170] sm:$0xff]
      %v329 = vld [vmem:[%s274 + $0x178] sm:$0xff]
      %v330 = vld [vmem:[%s274 + $0x180] sm:$0xff]
      %v331 = vld [vmem:[%s274 + $0x188] sm:$0xff]
      %v332 = vld [vmem:[%s274 + $0x190] sm:$0xff]
      %v333 = vld [vmem:[%s274 + $0x198] sm:$0xff]
      %v334 = vld [vmem:[%s274 + $0x1a0] sm:$0xff]
      %v335 = vld [vmem:[%s274 + $0x1a8] sm:$0xff]
      %v336 = vld [vmem:[%s274 + $0x1b0] sm:$0xff]
      %v337 = vld [vmem:[%s274 + $0x1b8] sm:$0xff]
      %v338 = vld [vmem:[%s274 + $0x1c0] sm:$0xff]
      %v339 = vld [vmem:[%s274 + $0x1c8] sm:$0xff]
      %v340 = vld [vmem:[%s274 + $0x1d0] sm:$0xff]
      %v341 = vld [vmem:[%s274 + $0x1d8] sm:$0xff]
      %v342 = vld [vmem:[%s274 + $0x1e0] sm:$0xff]
      %v343 = vld [vmem:[%s274 + $0x1e8] sm:$0xff]
      %v344 = vld [vmem:[%s274 + $0x1f0] sm:$0xff]
      %v345 = vld [vmem:[%s274 + $0x1f8] sm:$0xff]
      %v346 = vld [vmem:[%s1] sm:$0xff]
      %v347 = vld [vmem:[%s1 + $0x8] sm:$0xff]
      %v348 = vld [vmem:[%s1 + $0x10] sm:$0xff]
      %v349 = vld [vmem:[%s1 + $0x18] sm:$0xff]
      %v350 = vld [vmem:[%s2] sm:$0x1]
      %v352 = vlaneseq
      %v353 = vshrl.u32 %v352, 7
      %v354 = vsub.s32 0, %v353
      %v355 = vrot.slane %v350, %v354
      %vm357 = vcmask 261120
      %v359 = vsel %vm357, %v282, 0
      %v362 = vsel %vm357, %v283, 0
      %v365 = vsel %vm357, %v284, 0
      %v368 = vsel %vm357, %v285, 0
      %v371 = vsel %vm357, %v286, 0
      %v374 = vsel %vm357, %v287, 0
      %v377 = vsel %vm357, %v288, 0
      %v380 = vsel %vm357, %v289, 0
      %v383 = vsel %vm357, %v290, 0
      %v386 = vsel %vm357, %v291, 0
      %v389 = vsel %vm357, %v292, 0
      %v392 = vsel %vm357, %v293, 0
      %v395 = vsel %vm357, %v294, 0
      %v398 = vsel %vm357, %v295, 0
      %v401 = vsel %vm357, %v296, 0
      %v404 = vsel %vm357, %v297, 0
      %v407 = vsel %vm357, %v298, 0
      %v410 = vsel %vm357, %v299, 0
      %v413 = vsel %vm357, %v300, 0
      %v416 = vsel %vm357, %v301, 0
      %v419 = vsel %vm357, %v302, 0
      %v422 = vsel %vm357, %v303, 0
      %v425 = vsel %vm357, %v304, 0
      %v428 = vsel %vm357, %v305, 0
      %v431 = vsel %vm357, %v306, 0
      %v434 = vsel %vm357, %v307, 0
      %v437 = vsel %vm357, %v308, 0
      %v440 = vsel %vm357, %v309, 0
      %v443 = vsel %vm357, %v310, 0
      %v446 = vsel %vm357, %v311, 0
      %v449 = vsel %vm357, %v312, 0
      %v452 = vsel %vm357, %v313, 0
      %v455 = vsel %vm357, %v314, 0
      %v458 = vsel %vm357, %v315, 0
      %v461 = vsel %vm357, %v316, 0
      %v464 = vsel %vm357, %v317, 0
      %v467 = vsel %vm357, %v318, 0
      %v470 = vsel %vm357, %v319, 0
      %v473 = vsel %vm357, %v320, 0
      %v476 = vsel %vm357, %v321, 0
      %v479 = vsel %vm357, %v322, 0
      %v482 = vsel %vm357, %v323, 0
      %v485 = vsel %vm357, %v324, 0
      %v488 = vsel %vm357, %v325, 0
      %v491 = vsel %vm357, %v326, 0
      %v494 = vsel %vm357, %v327, 0
      %v497 = vsel %vm357, %v328, 0
      %v500 = vsel %vm357, %v329, 0
      %v503 = vsel %vm357, %v330, 0
      %v506 = vsel %vm357, %v331, 0
      %v509 = vsel %vm357, %v332, 0
      %v512 = vsel %vm357, %v333, 0
      %v515 = vsel %vm357, %v334, 0
      %v518 = vsel %vm357, %v335, 0
      %v521 = vsel %vm357, %v336, 0
      %v524 = vsel %vm357, %v337, 0
      %v527 = vsel %vm357, %v338, 0
      %v530 = vsel %vm357, %v339, 0
      %v533 = vsel %vm357, %v340, 0
      %v536 = vsel %vm357, %v341, 0
      %v539 = vsel %vm357, %v342, 0
      %v542 = vsel %vm357, %v343, 0
      %v545 = vsel %vm357, %v344, 0
      %v548 = vsel %vm357, %v345, 0
      %550 = vmatprep.subr.mxu0 0.0
      %551 = vmatpush1.msra.mxu0 0.0
      %552 = vmatprep.subr.mxu0 0.0
      %553 = vmatpush1.msra.mxu0 0.0
      %554 = vmatprep.subr.mxu0 0.0
      %555 = vmatpush1.msra.mxu0 0.0
      %556 = vmatprep.subr.mxu0 0.0
      %557 = vmatpush1.msra.mxu0 0.0
      %558 = vmatprep.subr.mxu0 0.0
      %559 = vmatpush1.msra.mxu0 0.0
      %560 = vmatprep.subr.mxu0 0.0
      %561 = vmatpush1.msra.mxu0 0.0
      %562 = vmatprep.subr.mxu0 0.0
      %563 = vmatpush1.msra.mxu0 0.0
      %564 = vmatprep.subr.mxu0 0.0
      %565 = vmatpush1.msra.mxu0 0.0
      %566 = vmatprep.subr.mxu0 0.0
      %567 = vmatpush1.msra.mxu0 0.0
      %568 = vmatprep.subr.mxu0 0.0
      %569 = vmatpush1.msra.mxu0 0.0
      %570 = vmatprep.subr.mxu0 0.0
      %571 = vmatpush1.msra.mxu0 0.0
      %572 = vmatprep.subr.mxu0 0.0
      %573 = vmatpush1.msra.mxu0 0.0
      %574 = vmatprep.subr.mxu0 0.0
      %575 = vmatpush1.msra.mxu0 %v349
      %576 = vmatprep.subr.mxu0 0.0
      %577 = vmatpush1.msra.mxu0 %v348
      %578 = vmatprep.subr.mxu0 0.0
      %579 = vmatpush1.msra.mxu0 %v347
      %580 = vmatprep.subr.mxu0 0.0
      %581 = vmatpush1.msra.mxu0 %v346
      %582 = vmatprep.subr.mxu0 0.0
      %583 = vmatpush2.msra.mxu0 0.0
      %584 = vmatprep.subr.mxu0 0.0
      %585 = vmatpush2.msra.mxu0 0.0
      %586 = vmatprep.subr.mxu0 0.0
      %587 = vmatpush2.msra.mxu0 0.0
      %588 = vmatprep.subr.mxu0 0.0
      %589 = vmatpush2.msra.mxu0 0.0
      %590 = vmatprep.subr.mxu0 0.0
      %591 = vmatpush2.msra.mxu0 0.0
      %592 = vmatprep.subr.mxu0 0.0
      %593 = vmatpush2.msra.mxu0 0.0
      %594 = vmatprep.subr.mxu0 0.0
      %595 = vmatpush2.msra.mxu0 0.0
      %596 = vmatprep.subr.mxu0 0.0
      %597 = vmatpush2.msra.mxu0 0.0
      %598 = vmatprep.subr.mxu0 0.0
      %599 = vmatpush2.msra.mxu0 0.0
      %600 = vmatprep.subr.mxu0 0.0
      %601 = vmatpush2.msra.mxu0 0.0
      %602 = vmatprep.subr.mxu0 0.0
      %603 = vmatpush2.msra.mxu0 0.0
      %604 = vmatprep.subr.mxu0 0.0
      %605 = vmatpush2.msra.mxu0 0.0
      %606 = vmatprep.subr.mxu0 0.0
      %607 = vmatpush2.msra.mxu0 0.0
      %608 = vmatprep.subr.mxu0 0.0
      %609 = vmatpush2.msra.mxu0 0.0
      %610 = vmatprep.subr.mxu0 0.0
      %611 = vmatpush2.msra.mxu0 0.0
      %612 = vmatprep.subr.mxu0 0.0
      %613 = vmatpush2.msra.mxu0 0.0
      %614 = vmatprep.mubr.f32.mxu0 0.0
      %615 = vmatmul.mubr.f32.gmra.mxu0 %v359
      %v616 = vpop.f32.mrf.mxu0
      %v617 = vadd.f32 %v355, %v616
      %v618 = vpop.f32.mrf.mxu0
      %619 = vmatprep.mubr.f32.mxu0 0.0
      %620 = vmatmul.mubr.f32.gmra.mxu0 %v362
      %v621 = vpop.f32.mrf.mxu0
      %v622 = vadd.f32 %v355, %v621
      %v623 = vpop.f32.mrf.mxu0
      %624 = vmatprep.mubr.f32.mxu0 0.0
      %625 = vmatmul.mubr.f32.gmra.mxu0 %v365
      %v626 = vpop.f32.mrf.mxu0
      %v627 = vadd.f32 %v355, %v626
      %v628 = vpop.f32.mrf.mxu0
      %629 = vmatprep.mubr.f32.mxu0 0.0
      %630 = vmatmul.mubr.f32.gmra.mxu0 %v368
      %v631 = vpop.f32.mrf.mxu0
      %v632 = vadd.f32 %v355, %v631
      %v633 = vpop.f32.mrf.mxu0
      %634 = vmatprep.mubr.f32.mxu0 0.0
      %635 = vmatmul.mubr.f32.gmra.mxu0 %v371
      %v636 = vpop.f32.mrf.mxu0
      %v637 = vadd.f32 %v355, %v636
      %v638 = vpop.f32.mrf.mxu0
      %639 = vmatprep.mubr.f32.mxu0 0.0
      %640 = vmatmul.mubr.f32.gmra.mxu0 %v374
      %v641 = vpop.f32.mrf.mxu0
      %v642 = vadd.f32 %v355, %v641
      %v643 = vpop.f32.mrf.mxu0
      %644 = vmatprep.mubr.f32.mxu0 0.0
      %645 = vmatmul.mubr.f32.gmra.mxu0 %v377
      %v646 = vpop.f32.mrf.mxu0
      %v647 = vadd.f32 %v355, %v646
      %v648 = vpop.f32.mrf.mxu0
      %649 = vmatprep.mubr.f32.mxu0 0.0
      %650 = vmatmul.mubr.f32.gmra.mxu0 %v380
      %v651 = vpop.f32.mrf.mxu0
      %v652 = vadd.f32 %v355, %v651
      %v653 = vpop.f32.mrf.mxu0
      %654 = vmatprep.mubr.f32.mxu0 0.0
      %655 = vmatmul.mubr.f32.gmra.mxu0 %v383
      %v656 = vpop.f32.mrf.mxu0
      %v657 = vadd.f32 %v355, %v656
      %v658 = vpop.f32.mrf.mxu0
      %659 = vmatprep.mubr.f32.mxu0 0.0
      %660 = vmatmul.mubr.f32.gmra.mxu0 %v386
      %v661 = vpop.f32.mrf.mxu0
      %v662 = vadd.f32 %v355, %v661
      %v663 = vpop.f32.mrf.mxu0
      %664 = vmatprep.mubr.f32.mxu0 0.0
      %665 = vmatmul.mubr.f32.gmra.mxu0 %v389
      %v666 = vpop.f32.mrf.mxu0
      %v667 = vadd.f32 %v355, %v666
      %v668 = vpop.f32.mrf.mxu0
      %669 = vmatprep.mubr.f32.mxu0 0.0
      %670 = vmatmul.mubr.f32.gmra.mxu0 %v392
      %v671 = vpop.f32.mrf.mxu0
      %v672 = vadd.f32 %v355, %v671
      %v673 = vpop.f32.mrf.mxu0
      %674 = vmatprep.mubr.f32.mxu0 0.0
      %675 = vmatmul.mubr.f32.gmra.mxu0 %v395
      %v676 = vpop.f32.mrf.mxu0
      %v677 = vadd.f32 %v355, %v676
      %v678 = vpop.f32.mrf.mxu0
      %679 = vmatprep.mubr.f32.mxu0 0.0
      %680 = vmatmul.mubr.f32.gmra.mxu0 %v398
      %v681 = vpop.f32.mrf.mxu0
      %v682 = vadd.f32 %v355, %v681
      %v683 = vpop.f32.mrf.mxu0
      %684 = vmatprep.mubr.f32.mxu0 0.0
      %685 = vmatmul.mubr.f32.gmra.mxu0 %v401
      %v686 = vpop.f32.mrf.mxu0
      %v687 = vadd.f32 %v355, %v686
      %v688 = vpop.f32.mrf.mxu0
      %689 = vmatprep.mubr.f32.mxu0 0.0
      %690 = vmatmul.mubr.f32.gmra.mxu0 %v404
      %v691 = vpop.f32.mrf.mxu0
      %v692 = vadd.f32 %v355, %v691
      %v693 = vpop.f32.mrf.mxu0
      %694 = vmatprep.mubr.f32.mxu0 0.0
      %695 = vmatmul.mubr.f32.gmra.mxu0 %v407
      %v696 = vpop.f32.mrf.mxu0
      %v697 = vadd.f32 %v355, %v696
      %v698 = vpop.f32.mrf.mxu0
      %699 = vmatprep.mubr.f32.mxu0 0.0
      %700 = vmatmul.mubr.f32.gmra.mxu0 %v410
      %v701 = vpop.f32.mrf.mxu0
      %v702 = vadd.f32 %v355, %v701
      %v703 = vpop.f32.mrf.mxu0
      %704 = vmatprep.mubr.f32.mxu0 0.0
      %705 = vmatmul.mubr.f32.gmra.mxu0 %v413
      %v706 = vpop.f32.mrf.mxu0
      %v707 = vadd.f32 %v355, %v706
      %v708 = vpop.f32.mrf.mxu0
      %709 = vmatprep.mubr.f32.mxu0 0.0
      %710 = vmatmul.mubr.f32.gmra.mxu0 %v416
      %v711 = vpop.f32.mrf.mxu0
      %v712 = vadd.f32 %v355, %v711
      %v713 = vpop.f32.mrf.mxu0
      %714 = vmatprep.mubr.f32.mxu0 0.0
      %715 = vmatmul.mubr.f32.gmra.mxu0 %v419
      %v716 = vpop.f32.mrf.mxu0
      %v717 = vadd.f32 %v355, %v716
      %v718 = vpop.f32.mrf.mxu0
      %719 = vmatprep.mubr.f32.mxu0 0.0
      %720 = vmatmul.mubr.f32.gmra.mxu0 %v422
      %v721 = vpop.f32.mrf.mxu0
      %v722 = vadd.f32 %v355, %v721
      %v723 = vpop.f32.mrf.mxu0
      %724 = vmatprep.mubr.f32.mxu0 0.0
      %725 = vmatmul.mubr.f32.gmra.mxu0 %v425
      %v726 = vpop.f32.mrf.mxu0
      %v727 = vadd.f32 %v355, %v726
      %v728 = vpop.f32.mrf.mxu0
      %729 = vmatprep.mubr.f32.mxu0 0.0
      %730 = vmatmul.mubr.f32.gmra.mxu0 %v428
      %v731 = vpop.f32.mrf.mxu0
      %v732 = vadd.f32 %v355, %v731
      %v733 = vpop.f32.mrf.mxu0
      %734 = vmatprep.mubr.f32.mxu0 0.0
      %735 = vmatmul.mubr.f32.gmra.mxu0 %v431
      %v736 = vpop.f32.mrf.mxu0
      %v737 = vadd.f32 %v355, %v736
      %v738 = vpop.f32.mrf.mxu0
      %739 = vmatprep.mubr.f32.mxu0 0.0
      %740 = vmatmul.mubr.f32.gmra.mxu0 %v434
      %v741 = vpop.f32.mrf.mxu0
      %v742 = vadd.f32 %v355, %v741
      %v743 = vpop.f32.mrf.mxu0
      %744 = vmatprep.mubr.f32.mxu0 0.0
      %745 = vmatmul.mubr.f32.gmra.mxu0 %v437
      %v746 = vpop.f32.mrf.mxu0
      %v747 = vadd.f32 %v355, %v746
      %v748 = vpop.f32.mrf.mxu0
      %749 = vmatprep.mubr.f32.mxu0 0.0
      %750 = vmatmul.mubr.f32.gmra.mxu0 %v440
      %v751 = vpop.f32.mrf.mxu0
      %v752 = vadd.f32 %v355, %v751
      %v753 = vpop.f32.mrf.mxu0
      %754 = vmatprep.mubr.f32.mxu0 0.0
      %755 = vmatmul.mubr.f32.gmra.mxu0 %v443
      %v756 = vpop.f32.mrf.mxu0
      %v757 = vadd.f32 %v355, %v756
      %v758 = vpop.f32.mrf.mxu0
      %759 = vmatprep.mubr.f32.mxu0 0.0
      %760 = vmatmul.mubr.f32.gmra.mxu0 %v446
      %v761 = vpop.f32.mrf.mxu0
      %v762 = vadd.f32 %v355, %v761
      %v763 = vpop.f32.mrf.mxu0
      %764 = vmatprep.mubr.f32.mxu0 0.0
      %765 = vmatmul.mubr.f32.gmra.mxu0 %v449
      %v766 = vpop.f32.mrf.mxu0
      %v767 = vadd.f32 %v355, %v766
      %v768 = vpop.f32.mrf.mxu0
      %769 = vmatprep.mubr.f32.mxu0 0.0
      %770 = vmatmul.mubr.f32.gmra.mxu0 %v452
      %v771 = vpop.f32.mrf.mxu0
      %v772 = vadd.f32 %v355, %v771
      %v773 = vpop.f32.mrf.mxu0
      %774 = vmatprep.mubr.f32.mxu0 0.0
      %775 = vmatmul.mubr.f32.gmra.mxu0 %v455
      %v776 = vpop.f32.mrf.mxu0
      %v777 = vadd.f32 %v355, %v776
      %v778 = vpop.f32.mrf.mxu0
      %779 = vmatprep.mubr.f32.mxu0 0.0
      %780 = vmatmul.mubr.f32.gmra.mxu0 %v458
      %v781 = vpop.f32.mrf.mxu0
      %v782 = vadd.f32 %v355, %v781
      %v783 = vpop.f32.mrf.mxu0
      %784 = vmatprep.mubr.f32.mxu0 0.0
      %785 = vmatmul.mubr.f32.gmra.mxu0 %v461
      %v786 = vpop.f32.mrf.mxu0
      %v787 = vadd.f32 %v355, %v786
      %v788 = vpop.f32.mrf.mxu0
      %789 = vmatprep.mubr.f32.mxu0 0.0
      %790 = vmatmul.mubr.f32.gmra.mxu0 %v464
      %v791 = vpop.f32.mrf.mxu0
      %v792 = vadd.f32 %v355, %v791
      %v793 = vpop.f32.mrf.mxu0
      %794 = vmatprep.mubr.f32.mxu0 0.0
      %795 = vmatmul.mubr.f32.gmra.mxu0 %v467
      %v796 = vpop.f32.mrf.mxu0
      %v797 = vadd.f32 %v355, %v796
      %v798 = vpop.f32.mrf.mxu0
      %799 = vmatprep.mubr.f32.mxu0 0.0
      %800 = vmatmul.mubr.f32.gmra.mxu0 %v470
      %v801 = vpop.f32.mrf.mxu0
      %v802 = vadd.f32 %v355, %v801
      %v803 = vpop.f32.mrf.mxu0
      %804 = vmatprep.mubr.f32.mxu0 0.0
      %805 = vmatmul.mubr.f32.gmra.mxu0 %v473
      %v806 = vpop.f32.mrf.mxu0
      %v807 = vadd.f32 %v355, %v806
      %v808 = vpop.f32.mrf.mxu0
      %809 = vmatprep.mubr.f32.mxu0 0.0
      %810 = vmatmul.mubr.f32.gmra.mxu0 %v476
      %v811 = vpop.f32.mrf.mxu0
      %v812 = vadd.f32 %v355, %v811
      %v813 = vpop.f32.mrf.mxu0
      %814 = vmatprep.mubr.f32.mxu0 0.0
      %815 = vmatmul.mubr.f32.gmra.mxu0 %v479
      %v816 = vpop.f32.mrf.mxu0
      %v817 = vadd.f32 %v355, %v816
      %v818 = vpop.f32.mrf.mxu0
      %819 = vmatprep.mubr.f32.mxu0 0.0
      %820 = vmatmul.mubr.f32.gmra.mxu0 %v482
      %v821 = vpop.f32.mrf.mxu0
      %v822 = vadd.f32 %v355, %v821
      %v823 = vpop.f32.mrf.mxu0
      %824 = vmatprep.mubr.f32.mxu0 0.0
      %825 = vmatmul.mubr.f32.gmra.mxu0 %v485
      %v826 = vpop.f32.mrf.mxu0
      %v827 = vadd.f32 %v355, %v826
      %v828 = vpop.f32.mrf.mxu0
      %829 = vmatprep.mubr.f32.mxu0 0.0
      %830 = vmatmul.mubr.f32.gmra.mxu0 %v488
      %v831 = vpop.f32.mrf.mxu0
      %v832 = vadd.f32 %v355, %v831
      %v833 = vpop.f32.mrf.mxu0
      %834 = vmatprep.mubr.f32.mxu0 0.0
      %835 = vmatmul.mubr.f32.gmra.mxu0 %v491
      %v836 = vpop.f32.mrf.mxu0
      %v837 = vadd.f32 %v355, %v836
      %v838 = vpop.f32.mrf.mxu0
      %839 = vmatprep.mubr.f32.mxu0 0.0
      %840 = vmatmul.mubr.f32.gmra.mxu0 %v494
      %v841 = vpop.f32.mrf.mxu0
      %v842 = vadd.f32 %v355, %v841
      %v843 = vpop.f32.mrf.mxu0
      %844 = vmatprep.mubr.f32.mxu0 0.0
      %845 = vmatmul.mubr.f32.gmra.mxu0 %v497
      %v846 = vpop.f32.mrf.mxu0
      %v847 = vadd.f32 %v355, %v846
      %v848 = vpop.f32.mrf.mxu0
      %849 = vmatprep.mubr.f32.mxu0 0.0
      %850 = vmatmul.mubr.f32.gmra.mxu0 %v500
      %v851 = vpop.f32.mrf.mxu0
      %v852 = vadd.f32 %v355, %v851
      %v853 = vpop.f32.mrf.mxu0
      %854 = vmatprep.mubr.f32.mxu0 0.0
      %855 = vmatmul.mubr.f32.gmra.mxu0 %v503
      %v856 = vpop.f32.mrf.mxu0
      %v857 = vadd.f32 %v355, %v856
      %v858 = vpop.f32.mrf.mxu0
      %859 = vmatprep.mubr.f32.mxu0 0.0
      %860 = vmatmul.mubr.f32.gmra.mxu0 %v506
      %v861 = vpop.f32.mrf.mxu0
      %v862 = vadd.f32 %v355, %v861
      %v863 = vpop.f32.mrf.mxu0
      %864 = vmatprep.mubr.f32.mxu0 0.0
      %865 = vmatmul.mubr.f32.gmra.mxu0 %v509
      %v866 = vpop.f32.mrf.mxu0
      %v867 = vadd.f32 %v355, %v866
      %v868 = vpop.f32.mrf.mxu0
      %869 = vmatprep.mubr.f32.mxu0 0.0
      %870 = vmatmul.mubr.f32.gmra.mxu0 %v512
      %v871 = vpop.f32.mrf.mxu0
      %v872 = vadd.f32 %v355, %v871
      %v873 = vpop.f32.mrf.mxu0
      %874 = vmatprep.mubr.f32.mxu0 0.0
      %875 = vmatmul.mubr.f32.gmra.mxu0 %v515
      %v876 = vpop.f32.mrf.mxu0
      %v877 = vadd.f32 %v355, %v876
      %v878 = vpop.f32.mrf.mxu0
      %879 = vmatprep.mubr.f32.mxu0 0.0
      %880 = vmatmul.mubr.f32.gmra.mxu0 %v518
      %v881 = vpop.f32.mrf.mxu0
      %v882 = vadd.f32 %v355, %v881
      %v883 = vpop.f32.mrf.mxu0
      %884 = vmatprep.mubr.f32.mxu0 0.0
      %885 = vmatmul.mubr.f32.gmra.mxu0 %v521
      %v886 = vpop.f32.mrf.mxu0
      %v887 = vadd.f32 %v355, %v886
      %v888 = vpop.f32.mrf.mxu0
      %889 = vmatprep.mubr.f32.mxu0 0.0
      %890 = vmatmul.mubr.f32.gmra.mxu0 %v524
      %v891 = vpop.f32.mrf.mxu0
      %v892 = vadd.f32 %v355, %v891
      %v893 = vpop.f32.mrf.mxu0
      %894 = vmatprep.mubr.f32.mxu0 0.0
      %895 = vmatmul.mubr.f32.gmra.mxu0 %v527
      %v896 = vpop.f32.mrf.mxu0
      %v897 = vadd.f32 %v355, %v896
      %v898 = vpop.f32.mrf.mxu0
      %899 = vmatprep.mubr.f32.mxu0 0.0
      %900 = vmatmul.mubr.f32.gmra.mxu0 %v530
      %v901 = vpop.f32.mrf.mxu0
      %v902 = vadd.f32 %v355, %v901
      %v903 = vpop.f32.mrf.mxu0
      %904 = vmatprep.mubr.f32.mxu0 0.0
      %905 = vmatmul.mubr.f32.gmra.mxu0 %v533
      %v906 = vpop.f32.mrf.mxu0
      %v907 = vadd.f32 %v355, %v906
      %v908 = vpop.f32.mrf.mxu0
      %909 = vmatprep.mubr.f32.mxu0 0.0
      %910 = vmatmul.mubr.f32.gmra.mxu0 %v536
      %v911 = vpop.f32.mrf.mxu0
      %v912 = vadd.f32 %v355, %v911
      %v913 = vpop.f32.mrf.mxu0
      %914 = vmatprep.mubr.f32.mxu0 0.0
      %915 = vmatmul.mubr.f32.gmra.mxu0 %v539
      %v916 = vpop.f32.mrf.mxu0
      %v917 = vadd.f32 %v355, %v916
      %v918 = vpop.f32.mrf.mxu0
      %919 = vmatprep.mubr.f32.mxu0 0.0
      %920 = vmatmul.mubr.f32.gmra.mxu0 %v542
      %v921 = vpop.f32.mrf.mxu0
      %v922 = vadd.f32 %v355, %v921
      %v923 = vpop.f32.mrf.mxu0
      %924 = vmatprep.mubr.f32.mxu0 0.0
      %925 = vmatmul.mubr.f32.gmra.mxu0 %v545
      %v926 = vpop.f32.mrf.mxu0
      %v927 = vadd.f32 %v355, %v926
      %v928 = vpop.f32.mrf.mxu0
      %929 = vmatprep.mubr.f32.mxu0 0.0
      %930 = vmatmul.mubr.f32.gmra.mxu0 %v548
      %v931 = vpop.f32.mrf.mxu0
      %v932 = vadd.f32 %v355, %v931
      %v933 = vpop.f32.mrf.mxu0
      %934 = vdwg.mxu0
      %v935 = vxor.u32 %v617, 2147483648
      %v936 = vxor.u32 %v622, 2147483648
      %v937 = vxor.u32 %v627, 2147483648
      %v938 = vxor.u32 %v632, 2147483648
      %v939 = vxor.u32 %v637, 2147483648
      %v940 = vxor.u32 %v642, 2147483648
      %v941 = vxor.u32 %v647, 2147483648
      %v942 = vxor.u32 %v652, 2147483648
      %v943 = vxor.u32 %v657, 2147483648
      %v944 = vxor.u32 %v662, 2147483648
      %v945 = vxor.u32 %v667, 2147483648
      %v946 = vxor.u32 %v672, 2147483648
      %v947 = vxor.u32 %v677, 2147483648
      %v948 = vxor.u32 %v682, 2147483648
      %v949 = vxor.u32 %v687, 2147483648
      %v950 = vxor.u32 %v692, 2147483648
      %v951 = vxor.u32 %v697, 2147483648
      %v952 = vxor.u32 %v702, 2147483648
      %v953 = vxor.u32 %v707, 2147483648
      %v954 = vxor.u32 %v712, 2147483648
      %v955 = vxor.u32 %v717, 2147483648
      %v956 = vxor.u32 %v722, 2147483648
      %v957 = vxor.u32 %v727, 2147483648
      %v958 = vxor.u32 %v732, 2147483648
      %v959 = vxor.u32 %v737, 2147483648
      %v960 = vxor.u32 %v742, 2147483648
      %v961 = vxor.u32 %v747, 2147483648
      %v962 = vxor.u32 %v752, 2147483648
      %v963 = vxor.u32 %v757, 2147483648
      %v964 = vxor.u32 %v762, 2147483648
      %v965 = vxor.u32 %v767, 2147483648
      %v966 = vxor.u32 %v772, 2147483648
      %v967 = vxor.u32 %v777, 2147483648
      %v968 = vxor.u32 %v782, 2147483648
      %v969 = vxor.u32 %v787, 2147483648
      %v970 = vxor.u32 %v792, 2147483648
      %v971 = vxor.u32 %v797, 2147483648
      %v972 = vxor.u32 %v802, 2147483648
      %v973 = vxor.u32 %v807, 2147483648
      %v974 = vxor.u32 %v812, 2147483648
      %v975 = vxor.u32 %v817, 2147483648
      %v976 = vxor.u32 %v822, 2147483648
      %v977 = vxor.u32 %v827, 2147483648
      %v978 = vxor.u32 %v832, 2147483648
      %v979 = vxor.u32 %v837, 2147483648
      %v980 = vxor.u32 %v842, 2147483648
      %v981 = vxor.u32 %v847, 2147483648
      %v982 = vxor.u32 %v852, 2147483648
      %v983 = vxor.u32 %v857, 2147483648
      %v984 = vxor.u32 %v862, 2147483648
      %v985 = vxor.u32 %v867, 2147483648
      %v986 = vxor.u32 %v872, 2147483648
      %v987 = vxor.u32 %v877, 2147483648
      %v988 = vxor.u32 %v882, 2147483648
      %v989 = vxor.u32 %v887, 2147483648
      %v990 = vxor.u32 %v892, 2147483648
      %v991 = vxor.u32 %v897, 2147483648
      %v992 = vxor.u32 %v902, 2147483648
      %v993 = vxor.u32 %v907, 2147483648
      %v994 = vxor.u32 %v912, 2147483648
      %v995 = vxor.u32 %v917, 2147483648
      %v996 = vxor.u32 %v922, 2147483648
      %v997 = vxor.u32 %v927, 2147483648
      %v998 = vxor.u32 %v932, 2147483648
      %v999 = vmul.f32 %v935, 1.442695
      %v1000 = vpow.pop %v999
      %v1001 = vmul.f32 %v936, 1.442695
      %v1002 = vpow.pop %v1001
      %v1003 = vmul.f32 %v937, 1.442695
      %v1004 = vpow.pop %v1003
      %v1005 = vmul.f32 %v938, 1.442695
      %v1006 = vpow.pop %v1005
      %v1007 = vmul.f32 %v939, 1.442695
      %v1008 = vpow.pop %v1007
      %v1009 = vmul.f32 %v940, 1.442695
      %v1010 = vpow.pop %v1009
      %v1011 = vmul.f32 %v941, 1.442695
      %v1012 = vpow.pop %v1011
      %v1013 = vmul.f32 %v942, 1.442695
      %v1014 = vpow.pop %v1013
      %v1015 = vmul.f32 %v943, 1.442695
      %v1016 = vpow.pop %v1015
      %v1017 = vmul.f32 %v944, 1.442695
      %v1018 = vpow.pop %v1017
      %v1019 = vmul.f32 %v945, 1.442695
      %v1020 = vpow.pop %v1019
      %v1021 = vmul.f32 %v946, 1.442695
      %v1022 = vpow.pop %v1021
      %v1023 = vmul.f32 %v947, 1.442695
      %v1024 = vpow.pop %v1023
      %v1025 = vmul.f32 %v948, 1.442695
      %v1026 = vpow.pop %v1025
      %v1027 = vmul.f32 %v949, 1.442695
      %v1028 = vpow.pop %v1027
      %v1029 = vmul.f32 %v950, 1.442695
      %v1030 = vpow.pop %v1029
      %v1031 = vmul.f32 %v951, 1.442695
      %v1032 = vpow.pop %v1031
      %v1033 = vmul.f32 %v952, 1.442695
      %v1034 = vpow.pop %v1033
      %v1035 = vmul.f32 %v953, 1.442695
      %v1036 = vpow.pop %v1035
      %v1037 = vmul.f32 %v954, 1.442695
      %v1038 = vpow.pop %v1037
      %v1039 = vmul.f32 %v955, 1.442695
      %v1040 = vpow.pop %v1039
      %v1041 = vmul.f32 %v956, 1.442695
      %v1042 = vpow.pop %v1041
      %v1043 = vmul.f32 %v957, 1.442695
      %v1044 = vpow.pop %v1043
      %v1045 = vmul.f32 %v958, 1.442695
      %v1046 = vpow.pop %v1045
      %v1047 = vmul.f32 %v959, 1.442695
      %v1048 = vpow.pop %v1047
      %v1049 = vmul.f32 %v960, 1.442695
      %v1050 = vpow.pop %v1049
      %v1051 = vmul.f32 %v961, 1.442695
      %v1052 = vpow.pop %v1051
      %v1053 = vmul.f32 %v962, 1.442695
      %v1054 = vpow.pop %v1053
      %v1055 = vmul.f32 %v963, 1.442695
      %v1056 = vpow.pop %v1055
      %v1057 = vmul.f32 %v964, 1.442695
      %v1058 = vpow.pop %v1057
      %v1059 = vmul.f32 %v965, 1.442695
      %v1060 = vpow.pop %v1059
      %v1061 = vmul.f32 %v966, 1.442695
      %v1062 = vpow.pop %v1061
      %v1063 = vmul.f32 %v967, 1.442695
      %v1064 = vpow.pop %v1063
      %v1065 = vmul.f32 %v968, 1.442695
      %v1066 = vpow.pop %v1065
      %v1067 = vmul.f32 %v969, 1.442695
      %v1068 = vpow.pop %v1067
      %v1069 = vmul.f32 %v970, 1.442695
      %v1070 = vpow.pop %v1069
      %v1071 = vmul.f32 %v971, 1.442695
      %v1072 = vpow.pop %v1071
      %v1073 = vmul.f32 %v972, 1.442695
      %v1074 = vpow.pop %v1073
      %v1075 = vmul.f32 %v973, 1.442695
      %v1076 = vpow.pop %v1075
      %v1077 = vmul.f32 %v974, 1.442695
      %v1078 = vpow.pop %v1077
      %v1079 = vmul.f32 %v975, 1.442695
      %v1080 = vpow.pop %v1079
      %v1081 = vmul.f32 %v976, 1.442695
      %v1082 = vpow.pop %v1081
      %v1083 = vmul.f32 %v977, 1.442695
      %v1084 = vpow.pop %v1083
      %v1085 = vmul.f32 %v978, 1.442695
      %v1086 = vpow.pop %v1085
      %v1087 = vmul.f32 %v979, 1.442695
      %v1088 = vpow.pop %v1087
      %v1089 = vmul.f32 %v980, 1.442695
      %v1090 = vpow.pop %v1089
      %v1091 = vmul.f32 %v981, 1.442695
      %v1092 = vpow.pop %v1091
      %v1093 = vmul.f32 %v982, 1.442695
      %v1094 = vpow.pop %v1093
      %v1095 = vmul.f32 %v983, 1.442695
      %v1096 = vpow.pop %v1095
      %v1097 = vmul.f32 %v984, 1.442695
      %v1098 = vpow.pop %v1097
      %v1099 = vmul.f32 %v985, 1.442695
      %v1100 = vpow.pop %v1099
      %v1101 = vmul.f32 %v986, 1.442695
      %v1102 = vpow.pop %v1101
      %v1103 = vmul.f32 %v987, 1.442695
      %v1104 = vpow.pop %v1103
      %v1105 = vmul.f32 %v988, 1.442695
      %v1106 = vpow.pop %v1105
      %v1107 = vmul.f32 %v989, 1.442695
      %v1108 = vpow.pop %v1107
      %v1109 = vmul.f32 %v990, 1.442695
      %v1110 = vpow.pop %v1109
      %v1111 = vmul.f32 %v991, 1.442695
      %v1112 = vpow.pop %v1111
      %v1113 = vmul.f32 %v992, 1.442695
      %v1114 = vpow.pop %v1113
      %v1115 = vmul.f32 %v993, 1.442695
      %v1116 = vpow.pop %v1115
      %v1117 = vmul.f32 %v994, 1.442695
      %v1118 = vpow.pop %v1117
      %v1119 = vmul.f32 %v995, 1.442695
      %v1120 = vpow.pop %v1119
      %v1121 = vmul.f32 %v996, 1.442695
      %v1122 = vpow.pop %v1121
      %v1123 = vmul.f32 %v997, 1.442695
      %v1124 = vpow.pop %v1123
      %v1125 = vmul.f32 %v998, 1.442695
      %v1126 = vpow.pop %v1125
      %v1127 = vadd.f32 %v1000, 1.0
      %v1128 = vadd.f32 %v1002, 1.0
      %v1129 = vadd.f32 %v1004, 1.0
      %v1130 = vadd.f32 %v1006, 1.0
      %v1131 = vadd.f32 %v1008, 1.0
      %v1132 = vadd.f32 %v1010, 1.0
      %v1133 = vadd.f32 %v1012, 1.0
      %v1134 = vadd.f32 %v1014, 1.0
      %v1135 = vadd.f32 %v1016, 1.0
      %v1136 = vadd.f32 %v1018, 1.0
      %v1137 = vadd.f32 %v1020, 1.0
      %v1138 = vadd.f32 %v1022, 1.0
      %v1139 = vadd.f32 %v1024, 1.0
      %v1140 = vadd.f32 %v1026, 1.0
      %v1141 = vadd.f32 %v1028, 1.0
      %v1142 = vadd.f32 %v1030, 1.0
      %v1143 = vadd.f32 %v1032, 1.0
      %v1144 = vadd.f32 %v1034, 1.0
      %v1145 = vadd.f32 %v1036, 1.0
      %v1146 = vadd.f32 %v1038, 1.0
      %v1147 = vadd.f32 %v1040, 1.0
      %v1148 = vadd.f32 %v1042, 1.0
      %v1149 = vadd.f32 %v1044, 1.0
      %v1150 = vadd.f32 %v1046, 1.0
      %v1151 = vadd.f32 %v1048, 1.0
      %v1152 = vadd.f32 %v1050, 1.0
      %v1153 = vadd.f32 %v1052, 1.0
      %v1154 = vadd.f32 %v1054, 1.0
      %v1155 = vadd.f32 %v1056, 1.0
      %v1156 = vadd.f32 %v1058, 1.0
      %v1157 = vadd.f32 %v1060, 1.0
      %v1158 = vadd.f32 %v1062, 1.0
      %v1159 = vadd.f32 %v1064, 1.0
      %v1160 = vadd.f32 %v1066, 1.0
      %v1161 = vadd.f32 %v1068, 1.0
      %v1162 = vadd.f32 %v1070, 1.0
      %v1163 = vadd.f32 %v1072, 1.0
      %v1164 = vadd.f32 %v1074, 1.0
      %v1165 = vadd.f32 %v1076, 1.0
      %v1166 = vadd.f32 %v1078, 1.0
      %v1167 = vadd.f32 %v1080, 1.0
      %v1168 = vadd.f32 %v1082, 1.0
      %v1169 = vadd.f32 %v1084, 1.0
      %v1170 = vadd.f32 %v1086, 1.0
      %v1171 = vadd.f32 %v1088, 1.0
      %v1172 = vadd.f32 %v1090, 1.0
      %v1173 = vadd.f32 %v1092, 1.0
      %v1174 = vadd.f32 %v1094, 1.0
      %v1175 = vadd.f32 %v1096, 1.0
      %v1176 = vadd.f32 %v1098, 1.0
      %v1177 = vadd.f32 %v1100, 1.0
      %v1178 = vadd.f32 %v1102, 1.0
      %v1179 = vadd.f32 %v1104, 1.0
      %v1180 = vadd.f32 %v1106, 1.0
      %v1181 = vadd.f32 %v1108, 1.0
      %v1182 = vadd.f32 %v1110, 1.0
      %v1183 = vadd.f32 %v1112, 1.0
      %v1184 = vadd.f32 %v1114, 1.0
      %v1185 = vadd.f32 %v1116, 1.0
      %v1186 = vadd.f32 %v1118, 1.0
      %v1187 = vadd.f32 %v1120, 1.0
      %v1188 = vadd.f32 %v1122, 1.0
      %v1189 = vadd.f32 %v1124, 1.0
      %v1190 = vadd.f32 %v1126, 1.0
      %v1191 = vrcp.pop %v1127
      %v1192 = vmul.f32 1.0, %v1191
      %v1193 = vrcp.pop %v1128
      %v1194 = vmul.f32 1.0, %v1193
      %v1195 = vrcp.pop %v1129
      %v1196 = vmul.f32 1.0, %v1195
      %v1197 = vrcp.pop %v1130
      %v1198 = vmul.f32 1.0, %v1197
      %v1199 = vrcp.pop %v1131
      %v1200 = vmul.f32 1.0, %v1199
      %v1201 = vrcp.pop %v1132
      %v1202 = vmul.f32 1.0, %v1201
      %v1203 = vrcp.pop %v1133
      %v1204 = vmul.f32 1.0, %v1203
      %v1205 = vrcp.pop %v1134
      %v1206 = vmul.f32 1.0, %v1205
      %v1207 = vrcp.pop %v1135
      %v1208 = vmul.f32 1.0, %v1207
      %v1209 = vrcp.pop %v1136
      %v1210 = vmul.f32 1.0, %v1209
      %v1211 = vrcp.pop %v1137
      %v1212 = vmul.f32 1.0, %v1211
      %v1213 = vrcp.pop %v1138
      %v1214 = vmul.f32 1.0, %v1213
      %v1215 = vrcp.pop %v1139
      %v1216 = vmul.f32 1.0, %v1215
      %v1217 = vrcp.pop %v1140
      %v1218 = vmul.f32 1.0, %v1217
      %v1219 = vrcp.pop %v1141
      %v1220 = vmul.f32 1.0, %v1219
      %v1221 = vrcp.pop %v1142
      %v1222 = vmul.f32 1.0, %v1221
      %v1223 = vrcp.pop %v1143
      %v1224 = vmul.f32 1.0, %v1223
      %v1225 = vrcp.pop %v1144
      %v1226 = vmul.f32 1.0, %v1225
      %v1227 = vrcp.pop %v1145
      %v1228 = vmul.f32 1.0, %v1227
      %v1229 = vrcp.pop %v1146
      %v1230 = vmul.f32 1.0, %v1229
      %v1231 = vrcp.pop %v1147
      %v1232 = vmul.f32 1.0, %v1231
      %v1233 = vrcp.pop %v1148
      %v1234 = vmul.f32 1.0, %v1233
      %v1235 = vrcp.pop %v1149
      %v1236 = vmul.f32 1.0, %v1235
      %v1237 = vrcp.pop %v1150
      %v1238 = vmul.f32 1.0, %v1237
      %v1239 = vrcp.pop %v1151
      %v1240 = vmul.f32 1.0, %v1239
      %v1241 = vrcp.pop %v1152
      %v1242 = vmul.f32 1.0, %v1241
      %v1243 = vrcp.pop %v1153
      %v1244 = vmul.f32 1.0, %v1243
      %v1245 = vrcp.pop %v1154
      %v1246 = vmul.f32 1.0, %v1245
      %v1247 = vrcp.pop %v1155
      %v1248 = vmul.f32 1.0, %v1247
      %v1249 = vrcp.pop %v1156
      %v1250 = vmul.f32 1.0, %v1249
      %v1251 = vrcp.pop %v1157
      %v1252 = vmul.f32 1.0, %v1251
      %v1253 = vrcp.pop %v1158
      %v1254 = vmul.f32 1.0, %v1253
      %v1255 = vrcp.pop %v1159
      %v1256 = vmul.f32 1.0, %v1255
      %v1257 = vrcp.pop %v1160
      %v1258 = vmul.f32 1.0, %v1257
      %v1259 = vrcp.pop %v1161
      %v1260 = vmul.f32 1.0, %v1259
      %v1261 = vrcp.pop %v1162
      %v1262 = vmul.f32 1.0, %v1261
      %v1263 = vrcp.pop %v1163
      %v1264 = vmul.f32 1.0, %v1263
      %v1265 = vrcp.pop %v1164
      %v1266 = vmul.f32 1.0, %v1265
      %v1267 = vrcp.pop %v1165
      %v1268 = vmul.f32 1.0, %v1267
      %v1269 = vrcp.pop %v1166
      %v1270 = vmul.f32 1.0, %v1269
      %v1271 = vrcp.pop %v1167
      %v1272 = vmul.f32 1.0, %v1271
      %v1273 = vrcp.pop %v1168
      %v1274 = vmul.f32 1.0, %v1273
      %v1275 = vrcp.pop %v1169
      %v1276 = vmul.f32 1.0, %v1275
      %v1277 = vrcp.pop %v1170
      %v1278 = vmul.f32 1.0, %v1277
      %v1279 = vrcp.pop %v1171
      %v1280 = vmul.f32 1.0, %v1279
      %v1281 = vrcp.pop %v1172
      %v1282 = vmul.f32 1.0, %v1281
      %v1283 = vrcp.pop %v1173
      %v1284 = vmul.f32 1.0, %v1283
      %v1285 = vrcp.pop %v1174
      %v1286 = vmul.f32 1.0, %v1285
      %v1287 = vrcp.pop %v1175
      %v1288 = vmul.f32 1.0, %v1287
      %v1289 = vrcp.pop %v1176
      %v1290 = vmul.f32 1.0, %v1289
      %v1291 = vrcp.pop %v1177
      %v1292 = vmul.f32 1.0, %v1291
      %v1293 = vrcp.pop %v1178
      %v1294 = vmul.f32 1.0, %v1293
      %v1295 = vrcp.pop %v1179
      %v1296 = vmul.f32 1.0, %v1295
      %v1297 = vrcp.pop %v1180
      %v1298 = vmul.f32 1.0, %v1297
      %v1299 = vrcp.pop %v1181
      %v1300 = vmul.f32 1.0, %v1299
      %v1301 = vrcp.pop %v1182
      %v1302 = vmul.f32 1.0, %v1301
      %v1303 = vrcp.pop %v1183
      %v1304 = vmul.f32 1.0, %v1303
      %v1305 = vrcp.pop %v1184
      %v1306 = vmul.f32 1.0, %v1305
      %v1307 = vrcp.pop %v1185
      %v1308 = vmul.f32 1.0, %v1307
      %v1309 = vrcp.pop %v1186
      %v1310 = vmul.f32 1.0, %v1309
      %v1311 = vrcp.pop %v1187
      %v1312 = vmul.f32 1.0, %v1311
      %v1313 = vrcp.pop %v1188
      %v1314 = vmul.f32 1.0, %v1313
      %v1315 = vrcp.pop %v1189
      %v1316 = vmul.f32 1.0, %v1315
      %v1317 = vrcp.pop %v1190
      %v1318 = vmul.f32 1.0, %v1317
      %v1319 = vmul.f32 %v617, %v1192
      %v1320 = vmul.f32 %v622, %v1194
      %v1321 = vmul.f32 %v627, %v1196
      %v1322 = vmul.f32 %v632, %v1198
      %v1323 = vmul.f32 %v637, %v1200
      %v1324 = vmul.f32 %v642, %v1202
      %v1325 = vmul.f32 %v647, %v1204
      %v1326 = vmul.f32 %v652, %v1206
      %v1327 = vmul.f32 %v657, %v1208
      %v1328 = vmul.f32 %v662, %v1210
      %v1329 = vmul.f32 %v667, %v1212
      %v1330 = vmul.f32 %v672, %v1214
      %v1331 = vmul.f32 %v677, %v1216
      %v1332 = vmul.f32 %v682, %v1218
      %v1333 = vmul.f32 %v687, %v1220
      %v1334 = vmul.f32 %v692, %v1222
      %v1335 = vmul.f32 %v697, %v1224
      %v1336 = vmul.f32 %v702, %v1226
      %v1337 = vmul.f32 %v707, %v1228
      %v1338 = vmul.f32 %v712, %v1230
      %v1339 = vmul.f32 %v717, %v1232
      %v1340 = vmul.f32 %v722, %v1234
      %v1341 = vmul.f32 %v727, %v1236
      %v1342 = vmul.f32 %v732, %v1238
      %v1343 = vmul.f32 %v737, %v1240
      %v1344 = vmul.f32 %v742, %v1242
      %v1345 = vmul.f32 %v747, %v1244
      %v1346 = vmul.f32 %v752, %v1246
      %v1347 = vmul.f32 %v757, %v1248
      %v1348 = vmul.f32 %v762, %v1250
      %v1349 = vmul.f32 %v767, %v1252
      %v1350 = vmul.f32 %v772, %v1254
      %v1351 = vmul.f32 %v777, %v1256
      %v1352 = vmul.f32 %v782, %v1258
      %v1353 = vmul.f32 %v787, %v1260
      %v1354 = vmul.f32 %v792, %v1262
      %v1355 = vmul.f32 %v797, %v1264
      %v1356 = vmul.f32 %v802, %v1266
      %v1357 = vmul.f32 %v807, %v1268
      %v1358 = vmul.f32 %v812, %v1270
      %v1359 = vmul.f32 %v817, %v1272
      %v1360 = vmul.f32 %v822, %v1274
      %v1361 = vmul.f32 %v827, %v1276
      %v1362 = vmul.f32 %v832, %v1278
      %v1363 = vmul.f32 %v837, %v1280
      %v1364 = vmul.f32 %v842, %v1282
      %v1365 = vmul.f32 %v847, %v1284
      %v1366 = vmul.f32 %v852, %v1286
      %v1367 = vmul.f32 %v857, %v1288
      %v1368 = vmul.f32 %v862, %v1290
      %v1369 = vmul.f32 %v867, %v1292
      %v1370 = vmul.f32 %v872, %v1294
      %v1371 = vmul.f32 %v877, %v1296
      %v1372 = vmul.f32 %v882, %v1298
      %v1373 = vmul.f32 %v887, %v1300
      %v1374 = vmul.f32 %v892, %v1302
      %v1375 = vmul.f32 %v897, %v1304
      %v1376 = vmul.f32 %v902, %v1306
      %v1377 = vmul.f32 %v907, %v1308
      %v1378 = vmul.f32 %v912, %v1310
      %v1379 = vmul.f32 %v917, %v1312
      %v1380 = vmul.f32 %v922, %v1314
      %v1381 = vmul.f32 %v927, %v1316
      %v1382 = vmul.f32 %v932, %v1318
      %v1383 = vld [vmem:[%s3] sm:$0xff]
      %v1384 = vld [vmem:[%s3 + $0x8] sm:$0xff]
      %v1385 = vld [vmem:[%s3 + $0x10] sm:$0xff]
      %v1386 = vld [vmem:[%s3 + $0x18] sm:$0xff]
      %v1387 = vld [vmem:[%s4] sm:$0x1]
      %v1389 = vlaneseq
      %v1390 = vshrl.u32 %v1389, 7
      %v1391 = vsub.s32 0, %v1390
      %v1392 = vrot.slane %v1387, %v1391
      %v1395 = vsel %vm357, %v1319, 0
      %v1398 = vsel %vm357, %v1320, 0
      %v1401 = vsel %vm357, %v1321, 0
      %v1404 = vsel %vm357, %v1322, 0
      %v1407 = vsel %vm357, %v1323, 0
      %v1410 = vsel %vm357, %v1324, 0
      %v1413 = vsel %vm357, %v1325, 0
      %v1416 = vsel %vm357, %v1326, 0
      %v1419 = vsel %vm357, %v1327, 0
      %v1422 = vsel %vm357, %v1328, 0
      %v1425 = vsel %vm357, %v1329, 0
      %v1428 = vsel %vm357, %v1330, 0
      %v1431 = vsel %vm357, %v1331, 0
      %v1434 = vsel %vm357, %v1332, 0
      %v1437 = vsel %vm357, %v1333, 0
      %v1440 = vsel %vm357, %v1334, 0
      %v1443 = vsel %vm357, %v1335, 0
      %v1446 = vsel %vm357, %v1336, 0
      %v1449 = vsel %vm357, %v1337, 0
      %v1452 = vsel %vm357, %v1338, 0
      %v1455 = vsel %vm357, %v1339, 0
      %v1458 = vsel %vm357, %v1340, 0
      %v1461 = vsel %vm357, %v1341, 0
      %v1464 = vsel %vm357, %v1342, 0
      %v1467 = vsel %vm357, %v1343, 0
      %v1470 = vsel %vm357, %v1344, 0
      %v1473 = vsel %vm357, %v1345, 0
      %v1476 = vsel %vm357, %v1346, 0
      %v1479 = vsel %vm357, %v1347, 0
      %v1482 = vsel %vm357, %v1348, 0
      %v1485 = vsel %vm357, %v1349, 0
      %v1488 = vsel %vm357, %v1350, 0
      %v1491 = vsel %vm357, %v1351, 0
      %v1494 = vsel %vm357, %v1352, 0
      %v1497 = vsel %vm357, %v1353, 0
      %v1500 = vsel %vm357, %v1354, 0
      %v1503 = vsel %vm357, %v1355, 0
      %v1506 = vsel %vm357, %v1356, 0
      %v1509 = vsel %vm357, %v1357, 0
      %v1512 = vsel %vm357, %v1358, 0
      %v1515 = vsel %vm357, %v1359, 0
      %v1518 = vsel %vm357, %v1360, 0
      %v1521 = vsel %vm357, %v1361, 0
      %v1524 = vsel %vm357, %v1362, 0
      %v1527 = vsel %vm357, %v1363, 0
      %v1530 = vsel %vm357, %v1364, 0
      %v1533 = vsel %vm357, %v1365, 0
      %v1536 = vsel %vm357, %v1366, 0
      %v1539 = vsel %vm357, %v1367, 0
      %v1542 = vsel %vm357, %v1368, 0
      %v1545 = vsel %vm357, %v1369, 0
      %v1548 = vsel %vm357, %v1370, 0
      %v1551 = vsel %vm357, %v1371, 0
      %v1554 = vsel %vm357, %v1372, 0
      %v1557 = vsel %vm357, %v1373, 0
      %v1560 = vsel %vm357, %v1374, 0
      %v1563 = vsel %vm357, %v1375, 0
      %v1566 = vsel %vm357, %v1376, 0
      %v1569 = vsel %vm357, %v1377, 0
      %v1572 = vsel %vm357, %v1378, 0
      %v1575 = vsel %vm357, %v1379, 0
      %v1578 = vsel %vm357, %v1380, 0
      %v1581 = vsel %vm357, %v1381, 0
      %v1584 = vsel %vm357, %v1382, 0
      %1586 = vmatprep.subr.mxu0 0.0
      %1587 = vmatpush1.msra.mxu0 0.0
      %1588 = vmatprep.subr.mxu0 0.0
      %1589 = vmatpush1.msra.mxu0 0.0
      %1590 = vmatprep.subr.mxu0 0.0
      %1591 = vmatpush1.msra.mxu0 0.0
      %1592 = vmatprep.subr.mxu0 0.0
      %1593 = vmatpush1.msra.mxu0 0.0
      %1594 = vmatprep.subr.mxu0 0.0
      %1595 = vmatpush1.msra.mxu0 0.0
      %1596 = vmatprep.subr.mxu0 0.0
      %1597 = vmatpush1.msra.mxu0 0.0
      %1598 = vmatprep.subr.mxu0 0.0
      %1599 = vmatpush1.msra.mxu0 0.0
      %1600 = vmatprep.subr.mxu0 0.0
      %1601 = vmatpush1.msra.mxu0 0.0
      %1602 = vmatprep.subr.mxu0 0.0
      %1603 = vmatpush1.msra.mxu0 0.0
      %1604 = vmatprep.subr.mxu0 0.0
      %1605 = vmatpush1.msra.mxu0 0.0
      %1606 = vmatprep.subr.mxu0 0.0
      %1607 = vmatpush1.msra.mxu0 0.0
      %1608 = vmatprep.subr.mxu0 0.0
      %1609 = vmatpush1.msra.mxu0 0.0
      %1610 = vmatprep.subr.mxu0 0.0
      %1611 = vmatpush1.msra.mxu0 %v1386
      %1612 = vmatprep.subr.mxu0 0.0
      %1613 = vmatpush1.msra.mxu0 %v1385
      %1614 = vmatprep.subr.mxu0 0.0
      %1615 = vmatpush1.msra.mxu0 %v1384
      %1616 = vmatprep.subr.mxu0 0.0
      %1617 = vmatpush1.msra.mxu0 %v1383
      %1618 = vmatprep.subr.mxu0 0.0
      %1619 = vmatpush2.msra.mxu0 0.0
      %1620 = vmatprep.subr.mxu0 0.0
      %1621 = vmatpush2.msra.mxu0 0.0
      %1622 = vmatprep.subr.mxu0 0.0
      %1623 = vmatpush2.msra.mxu0 0.0
      %1624 = vmatprep.subr.mxu0 0.0
      %1625 = vmatpush2.msra.mxu0 0.0
      %1626 = vmatprep.subr.mxu0 0.0
      %1627 = vmatpush2.msra.mxu0 0.0
      %1628 = vmatprep.subr.mxu0 0.0
      %1629 = vmatpush2.msra.mxu0 0.0
      %1630 = vmatprep.subr.mxu0 0.0
      %1631 = vmatpush2.msra.mxu0 0.0
      %1632 = vmatprep.subr.mxu0 0.0
      %1633 = vmatpush2.msra.mxu0 0.0
      %1634 = vmatprep.subr.mxu0 0.0
      %1635 = vmatpush2.msra.mxu0 0.0
      %1636 = vmatprep.subr.mxu0 0.0
      %1637 = vmatpush2.msra.mxu0 0.0
      %1638 = vmatprep.subr.mxu0 0.0
      %1639 = vmatpush2.msra.mxu0 0.0
      %1640 = vmatprep.subr.mxu0 0.0
      %1641 = vmatpush2.msra.mxu0 0.0
      %1642 = vmatprep.subr.mxu0 0.0
      %1643 = vmatpush2.msra.mxu0 0.0
      %1644 = vmatprep.subr.mxu0 0.0
      %1645 = vmatpush2.msra.mxu0 0.0
      %1646 = vmatprep.subr.mxu0 0.0
      %1647 = vmatpush2.msra.mxu0 0.0
      %1648 = vmatprep.subr.mxu0 0.0
      %1649 = vmatpush2.msra.mxu0 0.0
      %1650 = vmatprep.mubr.f32.mxu0 0.0
      %1651 = vmatmul.mubr.f32.gmra.mxu0 %v1395
      %v1652 = vpop.f32.mrf.mxu0
      %v1653 = vadd.f32 %v1392, %v1652
      %v1654 = vpop.f32.mrf.mxu0
      %1655 = vmatprep.mubr.f32.mxu0 0.0
      %1656 = vmatmul.mubr.f32.gmra.mxu0 %v1398
      %v1657 = vpop.f32.mrf.mxu0
      %v1658 = vadd.f32 %v1392, %v1657
      %v1659 = vpop.f32.mrf.mxu0
      %1660 = vmatprep.mubr.f32.mxu0 0.0
      %1661 = vmatmul.mubr.f32.gmra.mxu0 %v1401
      %v1662 = vpop.f32.mrf.mxu0
      %v1663 = vadd.f32 %v1392, %v1662
      %v1664 = vpop.f32.mrf.mxu0
      %1665 = vmatprep.mubr.f32.mxu0 0.0
      %1666 = vmatmul.mubr.f32.gmra.mxu0 %v1404
      %v1667 = vpop.f32.mrf.mxu0
      %v1668 = vadd.f32 %v1392, %v1667
      %v1669 = vpop.f32.mrf.mxu0
      %1670 = vmatprep.mubr.f32.mxu0 0.0
      %1671 = vmatmul.mubr.f32.gmra.mxu0 %v1407
      %v1672 = vpop.f32.mrf.mxu0
      %v1673 = vadd.f32 %v1392, %v1672
      %v1674 = vpop.f32.mrf.mxu0
      %1675 = vmatprep.mubr.f32.mxu0 0.0
      %1676 = vmatmul.mubr.f32.gmra.mxu0 %v1410
      %v1677 = vpop.f32.mrf.mxu0
      %v1678 = vadd.f32 %v1392, %v1677
      %v1679 = vpop.f32.mrf.mxu0
      %1680 = vmatprep.mubr.f32.mxu0 0.0
      %1681 = vmatmul.mubr.f32.gmra.mxu0 %v1413
      %v1682 = vpop.f32.mrf.mxu0
      %v1683 = vadd.f32 %v1392, %v1682
      %v1684 = vpop.f32.mrf.mxu0
      %1685 = vmatprep.mubr.f32.mxu0 0.0
      %1686 = vmatmul.mubr.f32.gmra.mxu0 %v1416
      %v1687 = vpop.f32.mrf.mxu0
      %v1688 = vadd.f32 %v1392, %v1687
      %v1689 = vpop.f32.mrf.mxu0
      %1690 = vmatprep.mubr.f32.mxu0 0.0
      %1691 = vmatmul.mubr.f32.gmra.mxu0 %v1419
      %v1692 = vpop.f32.mrf.mxu0
      %v1693 = vadd.f32 %v1392, %v1692
      %v1694 = vpop.f32.mrf.mxu0
      %1695 = vmatprep.mubr.f32.mxu0 0.0
      %1696 = vmatmul.mubr.f32.gmra.mxu0 %v1422
      %v1697 = vpop.f32.mrf.mxu0
      %v1698 = vadd.f32 %v1392, %v1697
      %v1699 = vpop.f32.mrf.mxu0
      %1700 = vmatprep.mubr.f32.mxu0 0.0
      %1701 = vmatmul.mubr.f32.gmra.mxu0 %v1425
      %v1702 = vpop.f32.mrf.mxu0
      %v1703 = vadd.f32 %v1392, %v1702
      %v1704 = vpop.f32.mrf.mxu0
      %1705 = vmatprep.mubr.f32.mxu0 0.0
      %1706 = vmatmul.mubr.f32.gmra.mxu0 %v1428
      %v1707 = vpop.f32.mrf.mxu0
      %v1708 = vadd.f32 %v1392, %v1707
      %v1709 = vpop.f32.mrf.mxu0
      %1710 = vmatprep.mubr.f32.mxu0 0.0
      %1711 = vmatmul.mubr.f32.gmra.mxu0 %v1431
      %v1712 = vpop.f32.mrf.mxu0
      %v1713 = vadd.f32 %v1392, %v1712
      %v1714 = vpop.f32.mrf.mxu0
      %1715 = vmatprep.mubr.f32.mxu0 0.0
      %1716 = vmatmul.mubr.f32.gmra.mxu0 %v1434
      %v1717 = vpop.f32.mrf.mxu0
      %v1718 = vadd.f32 %v1392, %v1717
      %v1719 = vpop.f32.mrf.mxu0
      %1720 = vmatprep.mubr.f32.mxu0 0.0
      %1721 = vmatmul.mubr.f32.gmra.mxu0 %v1437
      %v1722 = vpop.f32.mrf.mxu0
      %v1723 = vadd.f32 %v1392, %v1722
      %v1724 = vpop.f32.mrf.mxu0
      %1725 = vmatprep.mubr.f32.mxu0 0.0
      %1726 = vmatmul.mubr.f32.gmra.mxu0 %v1440
      %v1727 = vpop.f32.mrf.mxu0
      %v1728 = vadd.f32 %v1392, %v1727
      %v1729 = vpop.f32.mrf.mxu0
      %1730 = vmatprep.mubr.f32.mxu0 0.0
      %1731 = vmatmul.mubr.f32.gmra.mxu0 %v1443
      %v1732 = vpop.f32.mrf.mxu0
      %v1733 = vadd.f32 %v1392, %v1732
      %v1734 = vpop.f32.mrf.mxu0
      %1735 = vmatprep.mubr.f32.mxu0 0.0
      %1736 = vmatmul.mubr.f32.gmra.mxu0 %v1446
      %v1737 = vpop.f32.mrf.mxu0
      %v1738 = vadd.f32 %v1392, %v1737
      %v1739 = vpop.f32.mrf.mxu0
      %1740 = vmatprep.mubr.f32.mxu0 0.0
      %1741 = vmatmul.mubr.f32.gmra.mxu0 %v1449
      %v1742 = vpop.f32.mrf.mxu0
      %v1743 = vadd.f32 %v1392, %v1742
      %v1744 = vpop.f32.mrf.mxu0
      %1745 = vmatprep.mubr.f32.mxu0 0.0
      %1746 = vmatmul.mubr.f32.gmra.mxu0 %v1452
      %v1747 = vpop.f32.mrf.mxu0
      %v1748 = vadd.f32 %v1392, %v1747
      %v1749 = vpop.f32.mrf.mxu0
      %1750 = vmatprep.mubr.f32.mxu0 0.0
      %1751 = vmatmul.mubr.f32.gmra.mxu0 %v1455
      %v1752 = vpop.f32.mrf.mxu0
      %v1753 = vadd.f32 %v1392, %v1752
      %v1754 = vpop.f32.mrf.mxu0
      %1755 = vmatprep.mubr.f32.mxu0 0.0
      %1756 = vmatmul.mubr.f32.gmra.mxu0 %v1458
      %v1757 = vpop.f32.mrf.mxu0
      %v1758 = vadd.f32 %v1392, %v1757
      %v1759 = vpop.f32.mrf.mxu0
      %1760 = vmatprep.mubr.f32.mxu0 0.0
      %1761 = vmatmul.mubr.f32.gmra.mxu0 %v1461
      %v1762 = vpop.f32.mrf.mxu0
      %v1763 = vadd.f32 %v1392, %v1762
      %v1764 = vpop.f32.mrf.mxu0
      %1765 = vmatprep.mubr.f32.mxu0 0.0
      %1766 = vmatmul.mubr.f32.gmra.mxu0 %v1464
      %v1767 = vpop.f32.mrf.mxu0
      %v1768 = vadd.f32 %v1392, %v1767
      %v1769 = vpop.f32.mrf.mxu0
      %1770 = vmatprep.mubr.f32.mxu0 0.0
      %1771 = vmatmul.mubr.f32.gmra.mxu0 %v1467
      %v1772 = vpop.f32.mrf.mxu0
      %v1773 = vadd.f32 %v1392, %v1772
      %v1774 = vpop.f32.mrf.mxu0
      %1775 = vmatprep.mubr.f32.mxu0 0.0
      %1776 = vmatmul.mubr.f32.gmra.mxu0 %v1470
      %v1777 = vpop.f32.mrf.mxu0
      %v1778 = vadd.f32 %v1392, %v1777
      %v1779 = vpop.f32.mrf.mxu0
      %1780 = vmatprep.mubr.f32.mxu0 0.0
      %1781 = vmatmul.mubr.f32.gmra.mxu0 %v1473
      %v1782 = vpop.f32.mrf.mxu0
      %v1783 = vadd.f32 %v1392, %v1782
      %v1784 = vpop.f32.mrf.mxu0
      %1785 = vmatprep.mubr.f32.mxu0 0.0
      %1786 = vmatmul.mubr.f32.gmra.mxu0 %v1476
      %v1787 = vpop.f32.mrf.mxu0
      %v1788 = vadd.f32 %v1392, %v1787
      %v1789 = vpop.f32.mrf.mxu0
      %1790 = vmatprep.mubr.f32.mxu0 0.0
      %1791 = vmatmul.mubr.f32.gmra.mxu0 %v1479
      %v1792 = vpop.f32.mrf.mxu0
      %v1793 = vadd.f32 %v1392, %v1792
      %v1794 = vpop.f32.mrf.mxu0
      %1795 = vmatprep.mubr.f32.mxu0 0.0
      %1796 = vmatmul.mubr.f32.gmra.mxu0 %v1482
      %v1797 = vpop.f32.mrf.mxu0
      %v1798 = vadd.f32 %v1392, %v1797
      %v1799 = vpop.f32.mrf.mxu0
      %1800 = vmatprep.mubr.f32.mxu0 0.0
      %1801 = vmatmul.mubr.f32.gmra.mxu0 %v1485
      %v1802 = vpop.f32.mrf.mxu0
      %v1803 = vadd.f32 %v1392, %v1802
      %v1804 = vpop.f32.mrf.mxu0
      %1805 = vmatprep.mubr.f32.mxu0 0.0
      %1806 = vmatmul.mubr.f32.gmra.mxu0 %v1488
      %v1807 = vpop.f32.mrf.mxu0
      %v1808 = vadd.f32 %v1392, %v1807
      %v1809 = vpop.f32.mrf.mxu0
      %1810 = vmatprep.mubr.f32.mxu0 0.0
      %1811 = vmatmul.mubr.f32.gmra.mxu0 %v1491
      %v1812 = vpop.f32.mrf.mxu0
      %v1813 = vadd.f32 %v1392, %v1812
      %v1814 = vpop.f32.mrf.mxu0
      %1815 = vmatprep.mubr.f32.mxu0 0.0
      %1816 = vmatmul.mubr.f32.gmra.mxu0 %v1494
      %v1817 = vpop.f32.mrf.mxu0
      %v1818 = vadd.f32 %v1392, %v1817
      %v1819 = vpop.f32.mrf.mxu0
      %1820 = vmatprep.mubr.f32.mxu0 0.0
      %1821 = vmatmul.mubr.f32.gmra.mxu0 %v1497
      %v1822 = vpop.f32.mrf.mxu0
      %v1823 = vadd.f32 %v1392, %v1822
      %v1824 = vpop.f32.mrf.mxu0
      %1825 = vmatprep.mubr.f32.mxu0 0.0
      %1826 = vmatmul.mubr.f32.gmra.mxu0 %v1500
      %v1827 = vpop.f32.mrf.mxu0
      %v1828 = vadd.f32 %v1392, %v1827
      %v1829 = vpop.f32.mrf.mxu0
      %1830 = vmatprep.mubr.f32.mxu0 0.0
      %1831 = vmatmul.mubr.f32.gmra.mxu0 %v1503
      %v1832 = vpop.f32.mrf.mxu0
      %v1833 = vadd.f32 %v1392, %v1832
      %v1834 = vpop.f32.mrf.mxu0
      %1835 = vmatprep.mubr.f32.mxu0 0.0
      %1836 = vmatmul.mubr.f32.gmra.mxu0 %v1506
      %v1837 = vpop.f32.mrf.mxu0
      %v1838 = vadd.f32 %v1392, %v1837
      %v1839 = vpop.f32.mrf.mxu0
      %1840 = vmatprep.mubr.f32.mxu0 0.0
      %1841 = vmatmul.mubr.f32.gmra.mxu0 %v1509
      %v1842 = vpop.f32.mrf.mxu0
      %v1843 = vadd.f32 %v1392, %v1842
      %v1844 = vpop.f32.mrf.mxu0
      %1845 = vmatprep.mubr.f32.mxu0 0.0
      %1846 = vmatmul.mubr.f32.gmra.mxu0 %v1512
      %v1847 = vpop.f32.mrf.mxu0
      %v1848 = vadd.f32 %v1392, %v1847
      %v1849 = vpop.f32.mrf.mxu0
      %1850 = vmatprep.mubr.f32.mxu0 0.0
      %1851 = vmatmul.mubr.f32.gmra.mxu0 %v1515
      %v1852 = vpop.f32.mrf.mxu0
      %v1853 = vadd.f32 %v1392, %v1852
      %v1854 = vpop.f32.mrf.mxu0
      %1855 = vmatprep.mubr.f32.mxu0 0.0
      %1856 = vmatmul.mubr.f32.gmra.mxu0 %v1518
      %v1857 = vpop.f32.mrf.mxu0
      %v1858 = vadd.f32 %v1392, %v1857
      %v1859 = vpop.f32.mrf.mxu0
      %1860 = vmatprep.mubr.f32.mxu0 0.0
      %1861 = vmatmul.mubr.f32.gmra.mxu0 %v1521
      %v1862 = vpop.f32.mrf.mxu0
      %v1863 = vadd.f32 %v1392, %v1862
      %v1864 = vpop.f32.mrf.mxu0
      %1865 = vmatprep.mubr.f32.mxu0 0.0
      %1866 = vmatmul.mubr.f32.gmra.mxu0 %v1524
      %v1867 = vpop.f32.mrf.mxu0
      %v1868 = vadd.f32 %v1392, %v1867
      %v1869 = vpop.f32.mrf.mxu0
      %1870 = vmatprep.mubr.f32.mxu0 0.0
      %1871 = vmatmul.mubr.f32.gmra.mxu0 %v1527
      %v1872 = vpop.f32.mrf.mxu0
      %v1873 = vadd.f32 %v1392, %v1872
      %v1874 = vpop.f32.mrf.mxu0
      %1875 = vmatprep.mubr.f32.mxu0 0.0
      %1876 = vmatmul.mubr.f32.gmra.mxu0 %v1530
      %v1877 = vpop.f32.mrf.mxu0
      %v1878 = vadd.f32 %v1392, %v1877
      %v1879 = vpop.f32.mrf.mxu0
      %1880 = vmatprep.mubr.f32.mxu0 0.0
      %1881 = vmatmul.mubr.f32.gmra.mxu0 %v1533
      %v1882 = vpop.f32.mrf.mxu0
      %v1883 = vadd.f32 %v1392, %v1882
      %v1884 = vpop.f32.mrf.mxu0
      %1885 = vmatprep.mubr.f32.mxu0 0.0
      %1886 = vmatmul.mubr.f32.gmra.mxu0 %v1536
      %v1887 = vpop.f32.mrf.mxu0
      %v1888 = vadd.f32 %v1392, %v1887
      %v1889 = vpop.f32.mrf.mxu0
      %1890 = vmatprep.mubr.f32.mxu0 0.0
      %1891 = vmatmul.mubr.f32.gmra.mxu0 %v1539
      %v1892 = vpop.f32.mrf.mxu0
      %v1893 = vadd.f32 %v1392, %v1892
      %v1894 = vpop.f32.mrf.mxu0
      %1895 = vmatprep.mubr.f32.mxu0 0.0
      %1896 = vmatmul.mubr.f32.gmra.mxu0 %v1542
      %v1897 = vpop.f32.mrf.mxu0
      %v1898 = vadd.f32 %v1392, %v1897
      %v1899 = vpop.f32.mrf.mxu0
      %1900 = vmatprep.mubr.f32.mxu0 0.0
      %1901 = vmatmul.mubr.f32.gmra.mxu0 %v1545
      %v1902 = vpop.f32.mrf.mxu0
      %v1903 = vadd.f32 %v1392, %v1902
      %v1904 = vpop.f32.mrf.mxu0
      %1905 = vmatprep.mubr.f32.mxu0 0.0
      %1906 = vmatmul.mubr.f32.gmra.mxu0 %v1548
      %v1907 = vpop.f32.mrf.mxu0
      %v1908 = vadd.f32 %v1392, %v1907
      %v1909 = vpop.f32.mrf.mxu0
      %1910 = vmatprep.mubr.f32.mxu0 0.0
      %1911 = vmatmul.mubr.f32.gmra.mxu0 %v1551
      %v1912 = vpop.f32.mrf.mxu0
      %v1913 = vadd.f32 %v1392, %v1912
      %v1914 = vpop.f32.mrf.mxu0
      %1915 = vmatprep.mubr.f32.mxu0 0.0
      %1916 = vmatmul.mubr.f32.gmra.mxu0 %v1554
      %v1917 = vpop.f32.mrf.mxu0
      %v1918 = vadd.f32 %v1392, %v1917
      %v1919 = vpop.f32.mrf.mxu0
      %1920 = vmatprep.mubr.f32.mxu0 0.0
      %1921 = vmatmul.mubr.f32.gmra.mxu0 %v1557
      %v1922 = vpop.f32.mrf.mxu0
      %v1923 = vadd.f32 %v1392, %v1922
      %v1924 = vpop.f32.mrf.mxu0
      %1925 = vmatprep.mubr.f32.mxu0 0.0
      %1926 = vmatmul.mubr.f32.gmra.mxu0 %v1560
      %v1927 = vpop.f32.mrf.mxu0
      %v1928 = vadd.f32 %v1392, %v1927
      %v1929 = vpop.f32.mrf.mxu0
      %1930 = vmatprep.mubr.f32.mxu0 0.0
      %1931 = vmatmul.mubr.f32.gmra.mxu0 %v1563
      %v1932 = vpop.f32.mrf.mxu0
      %v1933 = vadd.f32 %v1392, %v1932
      %v1934 = vpop.f32.mrf.mxu0
      %1935 = vmatprep.mubr.f32.mxu0 0.0
      %1936 = vmatmul.mubr.f32.gmra.mxu0 %v1566
      %v1937 = vpop.f32.mrf.mxu0
      %v1938 = vadd.f32 %v1392, %v1937
      %v1939 = vpop.f32.mrf.mxu0
      %1940 = vmatprep.mubr.f32.mxu0 0.0
      %1941 = vmatmul.mubr.f32.gmra.mxu0 %v1569
      %v1942 = vpop.f32.mrf.mxu0
      %v1943 = vadd.f32 %v1392, %v1942
      %v1944 = vpop.f32.mrf.mxu0
      %1945 = vmatprep.mubr.f32.mxu0 0.0
      %1946 = vmatmul.mubr.f32.gmra.mxu0 %v1572
      %v1947 = vpop.f32.mrf.mxu0
      %v1948 = vadd.f32 %v1392, %v1947
      %v1949 = vpop.f32.mrf.mxu0
      %1950 = vmatprep.mubr.f32.mxu0 0.0
      %1951 = vmatmul.mubr.f32.gmra.mxu0 %v1575
      %v1952 = vpop.f32.mrf.mxu0
      %v1953 = vadd.f32 %v1392, %v1952
      %v1954 = vpop.f32.mrf.mxu0
      %1955 = vmatprep.mubr.f32.mxu0 0.0
      %1956 = vmatmul.mubr.f32.gmra.mxu0 %v1578
      %v1957 = vpop.f32.mrf.mxu0
      %v1958 = vadd.f32 %v1392, %v1957
      %v1959 = vpop.f32.mrf.mxu0
      %1960 = vmatprep.mubr.f32.mxu0 0.0
      %1961 = vmatmul.mubr.f32.gmra.mxu0 %v1581
      %v1962 = vpop.f32.mrf.mxu0
      %v1963 = vadd.f32 %v1392, %v1962
      %v1964 = vpop.f32.mrf.mxu0
      %1965 = vmatprep.mubr.f32.mxu0 0.0
      %1966 = vmatmul.mubr.f32.gmra.mxu0 %v1584
      %v1967 = vpop.f32.mrf.mxu0
      %v1968 = vadd.f32 %v1392, %v1967
      %v1969 = vpop.f32.mrf.mxu0
      %1970 = vdwg.mxu0
      %v1971 = vxor.u32 %v1653, 2147483648
      %v1972 = vxor.u32 %v1658, 2147483648
      %v1973 = vxor.u32 %v1663, 2147483648
      %v1974 = vxor.u32 %v1668, 2147483648
      %v1975 = vxor.u32 %v1673, 2147483648
      %v1976 = vxor.u32 %v1678, 2147483648
      %v1977 = vxor.u32 %v1683, 2147483648
      %v1978 = vxor.u32 %v1688, 2147483648
      %v1979 = vxor.u32 %v1693, 2147483648
      %v1980 = vxor.u32 %v1698, 2147483648
      %v1981 = vxor.u32 %v1703, 2147483648
      %v1982 = vxor.u32 %v1708, 2147483648
      %v1983 = vxor.u32 %v1713, 2147483648
      %v1984 = vxor.u32 %v1718, 2147483648
      %v1985 = vxor.u32 %v1723, 2147483648
      %v1986 = vxor.u32 %v1728, 2147483648
      %v1987 = vxor.u32 %v1733, 2147483648
      %v1988 = vxor.u32 %v1738, 2147483648
      %v1989 = vxor.u32 %v1743, 2147483648
      %v1990 = vxor.u32 %v1748, 2147483648
      %v1991 = vxor.u32 %v1753, 2147483648
      %v1992 = vxor.u32 %v1758, 2147483648
      %v1993 = vxor.u32 %v1763, 2147483648
      %v1994 = vxor.u32 %v1768, 2147483648
      %v1995 = vxor.u32 %v1773, 2147483648
      %v1996 = vxor.u32 %v1778, 2147483648
      %v1997 = vxor.u32 %v1783, 2147483648
      %v1998 = vxor.u32 %v1788, 2147483648
      %v1999 = vxor.u32 %v1793, 2147483648
      %v2000 = vxor.u32 %v1798, 2147483648
      %v2001 = vxor.u32 %v1803, 2147483648
      %v2002 = vxor.u32 %v1808, 2147483648
      %v2003 = vxor.u32 %v1813, 2147483648
      %v2004 = vxor.u32 %v1818, 2147483648
      %v2005 = vxor.u32 %v1823, 2147483648
      %v2006 = vxor.u32 %v1828, 2147483648
      %v2007 = vxor.u32 %v1833, 2147483648
      %v2008 = vxor.u32 %v1838, 2147483648
      %v2009 = vxor.u32 %v1843, 2147483648
      %v2010 = vxor.u32 %v1848, 2147483648
      %v2011 = vxor.u32 %v1853, 2147483648
      %v2012 = vxor.u32 %v1858, 2147483648
      %v2013 = vxor.u32 %v1863, 2147483648
      %v2014 = vxor.u32 %v1868, 2147483648
      %v2015 = vxor.u32 %v1873, 2147483648
      %v2016 = vxor.u32 %v1878, 2147483648
      %v2017 = vxor.u32 %v1883, 2147483648
      %v2018 = vxor.u32 %v1888, 2147483648
      %v2019 = vxor.u32 %v1893, 2147483648
      %v2020 = vxor.u32 %v1898, 2147483648
      %v2021 = vxor.u32 %v1903, 2147483648
      %v2022 = vxor.u32 %v1908, 2147483648
      %v2023 = vxor.u32 %v1913, 2147483648
      %v2024 = vxor.u32 %v1918, 2147483648
      %v2025 = vxor.u32 %v1923, 2147483648
      %v2026 = vxor.u32 %v1928, 2147483648
      %v2027 = vxor.u32 %v1933, 2147483648
      %v2028 = vxor.u32 %v1938, 2147483648
      %v2029 = vxor.u32 %v1943, 2147483648
      %v2030 = vxor.u32 %v1948, 2147483648
      %v2031 = vxor.u32 %v1953, 2147483648
      %v2032 = vxor.u32 %v1958, 2147483648
      %v2033 = vxor.u32 %v1963, 2147483648
      %v2034 = vxor.u32 %v1968, 2147483648
      %v2035 = vmul.f32 %v1971, 1.442695
      %v2036 = vpow.pop %v2035
      %v2037 = vmul.f32 %v1972, 1.442695
      %v2038 = vpow.pop %v2037
      %v2039 = vmul.f32 %v1973, 1.442695
      %v2040 = vpow.pop %v2039
      %v2041 = vmul.f32 %v1974, 1.442695
      %v2042 = vpow.pop %v2041
      %v2043 = vmul.f32 %v1975, 1.442695
      %v2044 = vpow.pop %v2043
      %v2045 = vmul.f32 %v1976, 1.442695
      %v2046 = vpow.pop %v2045
      %v2047 = vmul.f32 %v1977, 1.442695
      %v2048 = vpow.pop %v2047
      %v2049 = vmul.f32 %v1978, 1.442695
      %v2050 = vpow.pop %v2049
      %v2051 = vmul.f32 %v1979, 1.442695
      %v2052 = vpow.pop %v2051
      %v2053 = vmul.f32 %v1980, 1.442695
      %v2054 = vpow.pop %v2053
      %v2055 = vmul.f32 %v1981, 1.442695
      %v2056 = vpow.pop %v2055
      %v2057 = vmul.f32 %v1982, 1.442695
      %v2058 = vpow.pop %v2057
      %v2059 = vmul.f32 %v1983, 1.442695
      %v2060 = vpow.pop %v2059
      %v2061 = vmul.f32 %v1984, 1.442695
      %v2062 = vpow.pop %v2061
      %v2063 = vmul.f32 %v1985, 1.442695
      %v2064 = vpow.pop %v2063
      %v2065 = vmul.f32 %v1986, 1.442695
      %v2066 = vpow.pop %v2065
      %v2067 = vmul.f32 %v1987, 1.442695
      %v2068 = vpow.pop %v2067
      %v2069 = vmul.f32 %v1988, 1.442695
      %v2070 = vpow.pop %v2069
      %v2071 = vmul.f32 %v1989, 1.442695
      %v2072 = vpow.pop %v2071
      %v2073 = vmul.f32 %v1990, 1.442695
      %v2074 = vpow.pop %v2073
      %v2075 = vmul.f32 %v1991, 1.442695
      %v2076 = vpow.pop %v2075
      %v2077 = vmul.f32 %v1992, 1.442695
      %v2078 = vpow.pop %v2077
      %v2079 = vmul.f32 %v1993, 1.442695
      %v2080 = vpow.pop %v2079
      %v2081 = vmul.f32 %v1994, 1.442695
      %v2082 = vpow.pop %v2081
      %v2083 = vmul.f32 %v1995, 1.442695
      %v2084 = vpow.pop %v2083
      %v2085 = vmul.f32 %v1996, 1.442695
      %v2086 = vpow.pop %v2085
      %v2087 = vmul.f32 %v1997, 1.442695
      %v2088 = vpow.pop %v2087
      %v2089 = vmul.f32 %v1998, 1.442695
      %v2090 = vpow.pop %v2089
      %v2091 = vmul.f32 %v1999, 1.442695
      %v2092 = vpow.pop %v2091
      %v2093 = vmul.f32 %v2000, 1.442695
      %v2094 = vpow.pop %v2093
      %v2095 = vmul.f32 %v2001, 1.442695
      %v2096 = vpow.pop %v2095
      %v2097 = vmul.f32 %v2002, 1.442695
      %v2098 = vpow.pop %v2097
      %v2099 = vmul.f32 %v2003, 1.442695
      %v2100 = vpow.pop %v2099
      %v2101 = vmul.f32 %v2004, 1.442695
      %v2102 = vpow.pop %v2101
      %v2103 = vmul.f32 %v2005, 1.442695
      %v2104 = vpow.pop %v2103
      %v2105 = vmul.f32 %v2006, 1.442695
      %v2106 = vpow.pop %v2105
      %v2107 = vmul.f32 %v2007, 1.442695
      %v2108 = vpow.pop %v2107
      %v2109 = vmul.f32 %v2008, 1.442695
      %v2110 = vpow.pop %v2109
      %v2111 = vmul.f32 %v2009, 1.442695
      %v2112 = vpow.pop %v2111
      %v2113 = vmul.f32 %v2010, 1.442695
      %v2114 = vpow.pop %v2113
      %v2115 = vmul.f32 %v2011, 1.442695
      %v2116 = vpow.pop %v2115
      %v2117 = vmul.f32 %v2012, 1.442695
      %v2118 = vpow.pop %v2117
      %v2119 = vmul.f32 %v2013, 1.442695
      %v2120 = vpow.pop %v2119
      %v2121 = vmul.f32 %v2014, 1.442695
      %v2122 = vpow.pop %v2121
      %v2123 = vmul.f32 %v2015, 1.442695
      %v2124 = vpow.pop %v2123
      %v2125 = vmul.f32 %v2016, 1.442695
      %v2126 = vpow.pop %v2125
      %v2127 = vmul.f32 %v2017, 1.442695
      %v2128 = vpow.pop %v2127
      %v2129 = vmul.f32 %v2018, 1.442695
      %v2130 = vpow.pop %v2129
      %v2131 = vmul.f32 %v2019, 1.442695
      %v2132 = vpow.pop %v2131
      %v2133 = vmul.f32 %v2020, 1.442695
      %v2134 = vpow.pop %v2133
      %v2135 = vmul.f32 %v2021, 1.442695
      %v2136 = vpow.pop %v2135
      %v2137 = vmul.f32 %v2022, 1.442695
      %v2138 = vpow.pop %v2137
      %v2139 = vmul.f32 %v2023, 1.442695
      %v2140 = vpow.pop %v2139
      %v2141 = vmul.f32 %v2024, 1.442695
      %v2142 = vpow.pop %v2141
      %v2143 = vmul.f32 %v2025, 1.442695
      %v2144 = vpow.pop %v2143
      %v2145 = vmul.f32 %v2026, 1.442695
      %v2146 = vpow.pop %v2145
      %v2147 = vmul.f32 %v2027, 1.442695
      %v2148 = vpow.pop %v2147
      %v2149 = vmul.f32 %v2028, 1.442695
      %v2150 = vpow.pop %v2149
      %v2151 = vmul.f32 %v2029, 1.442695
      %v2152 = vpow.pop %v2151
      %v2153 = vmul.f32 %v2030, 1.442695
      %v2154 = vpow.pop %v2153
      %v2155 = vmul.f32 %v2031, 1.442695
      %v2156 = vpow.pop %v2155
      %v2157 = vmul.f32 %v2032, 1.442695
      %v2158 = vpow.pop %v2157
      %v2159 = vmul.f32 %v2033, 1.442695
      %v2160 = vpow.pop %v2159
      %v2161 = vmul.f32 %v2034, 1.442695
      %v2162 = vpow.pop %v2161
      %v2163 = vadd.f32 %v2036, 1.0
      %v2164 = vadd.f32 %v2038, 1.0
      %v2165 = vadd.f32 %v2040, 1.0
      %v2166 = vadd.f32 %v2042, 1.0
      %v2167 = vadd.f32 %v2044, 1.0
      %v2168 = vadd.f32 %v2046, 1.0
      %v2169 = vadd.f32 %v2048, 1.0
      %v2170 = vadd.f32 %v2050, 1.0
      %v2171 = vadd.f32 %v2052, 1.0
      %v2172 = vadd.f32 %v2054, 1.0
      %v2173 = vadd.f32 %v2056, 1.0
      %v2174 = vadd.f32 %v2058, 1.0
      %v2175 = vadd.f32 %v2060, 1.0
      %v2176 = vadd.f32 %v2062, 1.0
      %v2177 = vadd.f32 %v2064, 1.0
      %v2178 = vadd.f32 %v2066, 1.0
      %v2179 = vadd.f32 %v2068, 1.0
      %v2180 = vadd.f32 %v2070, 1.0
      %v2181 = vadd.f32 %v2072, 1.0
      %v2182 = vadd.f32 %v2074, 1.0
      %v2183 = vadd.f32 %v2076, 1.0
      %v2184 = vadd.f32 %v2078, 1.0
      %v2185 = vadd.f32 %v2080, 1.0
      %v2186 = vadd.f32 %v2082, 1.0
      %v2187 = vadd.f32 %v2084, 1.0
      %v2188 = vadd.f32 %v2086, 1.0
      %v2189 = vadd.f32 %v2088, 1.0
      %v2190 = vadd.f32 %v2090, 1.0
      %v2191 = vadd.f32 %v2092, 1.0
      %v2192 = vadd.f32 %v2094, 1.0
      %v2193 = vadd.f32 %v2096, 1.0
      %v2194 = vadd.f32 %v2098, 1.0
      %v2195 = vadd.f32 %v2100, 1.0
      %v2196 = vadd.f32 %v2102, 1.0
      %v2197 = vadd.f32 %v2104, 1.0
      %v2198 = vadd.f32 %v2106, 1.0
      %v2199 = vadd.f32 %v2108, 1.0
      %v2200 = vadd.f32 %v2110, 1.0
      %v2201 = vadd.f32 %v2112, 1.0
      %v2202 = vadd.f32 %v2114, 1.0
      %v2203 = vadd.f32 %v2116, 1.0
      %v2204 = vadd.f32 %v2118, 1.0
      %v2205 = vadd.f32 %v2120, 1.0
      %v2206 = vadd.f32 %v2122, 1.0
      %v2207 = vadd.f32 %v2124, 1.0
      %v2208 = vadd.f32 %v2126, 1.0
      %v2209 = vadd.f32 %v2128, 1.0
      %v2210 = vadd.f32 %v2130, 1.0
      %v2211 = vadd.f32 %v2132, 1.0
      %v2212 = vadd.f32 %v2134, 1.0
      %v2213 = vadd.f32 %v2136, 1.0
      %v2214 = vadd.f32 %v2138, 1.0
      %v2215 = vadd.f32 %v2140, 1.0
      %v2216 = vadd.f32 %v2142, 1.0
      %v2217 = vadd.f32 %v2144, 1.0
      %v2218 = vadd.f32 %v2146, 1.0
      %v2219 = vadd.f32 %v2148, 1.0
      %v2220 = vadd.f32 %v2150, 1.0
      %v2221 = vadd.f32 %v2152, 1.0
      %v2222 = vadd.f32 %v2154, 1.0
      %v2223 = vadd.f32 %v2156, 1.0
      %v2224 = vadd.f32 %v2158, 1.0
      %v2225 = vadd.f32 %v2160, 1.0
      %v2226 = vadd.f32 %v2162, 1.0
      %v2227 = vrcp.pop %v2163
      %v2228 = vmul.f32 1.0, %v2227
      %v2229 = vrcp.pop %v2164
      %v2230 = vmul.f32 1.0, %v2229
      %v2231 = vrcp.pop %v2165
      %v2232 = vmul.f32 1.0, %v2231
      %v2233 = vrcp.pop %v2166
      %v2234 = vmul.f32 1.0, %v2233
      %v2235 = vrcp.pop %v2167
      %v2236 = vmul.f32 1.0, %v2235
      %v2237 = vrcp.pop %v2168
      %v2238 = vmul.f32 1.0, %v2237
      %v2239 = vrcp.pop %v2169
      %v2240 = vmul.f32 1.0, %v2239
      %v2241 = vrcp.pop %v2170
      %v2242 = vmul.f32 1.0, %v2241
      %v2243 = vrcp.pop %v2171
      %v2244 = vmul.f32 1.0, %v2243
      %v2245 = vrcp.pop %v2172
      %v2246 = vmul.f32 1.0, %v2245
      %v2247 = vrcp.pop %v2173
      %v2248 = vmul.f32 1.0, %v2247
      %v2249 = vrcp.pop %v2174
      %v2250 = vmul.f32 1.0, %v2249
      %v2251 = vrcp.pop %v2175
      %v2252 = vmul.f32 1.0, %v2251
      %v2253 = vrcp.pop %v2176
      %v2254 = vmul.f32 1.0, %v2253
      %v2255 = vrcp.pop %v2177
      %v2256 = vmul.f32 1.0, %v2255
      %v2257 = vrcp.pop %v2178
      %v2258 = vmul.f32 1.0, %v2257
      %v2259 = vrcp.pop %v2179
      %v2260 = vmul.f32 1.0, %v2259
      %v2261 = vrcp.pop %v2180
      %v2262 = vmul.f32 1.0, %v2261
      %v2263 = vrcp.pop %v2181
      %v2264 = vmul.f32 1.0, %v2263
      %v2265 = vrcp.pop %v2182
      %v2266 = vmul.f32 1.0, %v2265
      %v2267 = vrcp.pop %v2183
      %v2268 = vmul.f32 1.0, %v2267
      %v2269 = vrcp.pop %v2184
      %v2270 = vmul.f32 1.0, %v2269
      %v2271 = vrcp.pop %v2185
      %v2272 = vmul.f32 1.0, %v2271
      %v2273 = vrcp.pop %v2186
      %v2274 = vmul.f32 1.0, %v2273
      %v2275 = vrcp.pop %v2187
      %v2276 = vmul.f32 1.0, %v2275
      %v2277 = vrcp.pop %v2188
      %v2278 = vmul.f32 1.0, %v2277
      %v2279 = vrcp.pop %v2189
      %v2280 = vmul.f32 1.0, %v2279
      %v2281 = vrcp.pop %v2190
      %v2282 = vmul.f32 1.0, %v2281
      %v2283 = vrcp.pop %v2191
      %v2284 = vmul.f32 1.0, %v2283
      %v2285 = vrcp.pop %v2192
      %v2286 = vmul.f32 1.0, %v2285
      %v2287 = vrcp.pop %v2193
      %v2288 = vmul.f32 1.0, %v2287
      %v2289 = vrcp.pop %v2194
      %v2290 = vmul.f32 1.0, %v2289
      %v2291 = vrcp.pop %v2195
      %v2292 = vmul.f32 1.0, %v2291
      %v2293 = vrcp.pop %v2196
      %v2294 = vmul.f32 1.0, %v2293
      %v2295 = vrcp.pop %v2197
      %v2296 = vmul.f32 1.0, %v2295
      %v2297 = vrcp.pop %v2198
      %v2298 = vmul.f32 1.0, %v2297
      %v2299 = vrcp.pop %v2199
      %v2300 = vmul.f32 1.0, %v2299
      %v2301 = vrcp.pop %v2200
      %v2302 = vmul.f32 1.0, %v2301
      %v2303 = vrcp.pop %v2201
      %v2304 = vmul.f32 1.0, %v2303
      %v2305 = vrcp.pop %v2202
      %v2306 = vmul.f32 1.0, %v2305
      %v2307 = vrcp.pop %v2203
      %v2308 = vmul.f32 1.0, %v2307
      %v2309 = vrcp.pop %v2204
      %v2310 = vmul.f32 1.0, %v2309
      %v2311 = vrcp.pop %v2205
      %v2312 = vmul.f32 1.0, %v2311
      %v2313 = vrcp.pop %v2206
      %v2314 = vmul.f32 1.0, %v2313
      %v2315 = vrcp.pop %v2207
      %v2316 = vmul.f32 1.0, %v2315
      %v2317 = vrcp.pop %v2208
      %v2318 = vmul.f32 1.0, %v2317
      %v2319 = vrcp.pop %v2209
      %v2320 = vmul.f32 1.0, %v2319
      %v2321 = vrcp.pop %v2210
      %v2322 = vmul.f32 1.0, %v2321
      %v2323 = vrcp.pop %v2211
      %v2324 = vmul.f32 1.0, %v2323
      %v2325 = vrcp.pop %v2212
      %v2326 = vmul.f32 1.0, %v2325
      %v2327 = vrcp.pop %v2213
      %v2328 = vmul.f32 1.0, %v2327
      %v2329 = vrcp.pop %v2214
      %v2330 = vmul.f32 1.0, %v2329
      %v2331 = vrcp.pop %v2215
      %v2332 = vmul.f32 1.0, %v2331
      %v2333 = vrcp.pop %v2216
      %v2334 = vmul.f32 1.0, %v2333
      %v2335 = vrcp.pop %v2217
      %v2336 = vmul.f32 1.0, %v2335
      %v2337 = vrcp.pop %v2218
      %v2338 = vmul.f32 1.0, %v2337
      %v2339 = vrcp.pop %v2219
      %v2340 = vmul.f32 1.0, %v2339
      %v2341 = vrcp.pop %v2220
      %v2342 = vmul.f32 1.0, %v2341
      %v2343 = vrcp.pop %v2221
      %v2344 = vmul.f32 1.0, %v2343
      %v2345 = vrcp.pop %v2222
      %v2346 = vmul.f32 1.0, %v2345
      %v2347 = vrcp.pop %v2223
      %v2348 = vmul.f32 1.0, %v2347
      %v2349 = vrcp.pop %v2224
      %v2350 = vmul.f32 1.0, %v2349
      %v2351 = vrcp.pop %v2225
      %v2352 = vmul.f32 1.0, %v2351
      %v2353 = vrcp.pop %v2226
      %v2354 = vmul.f32 1.0, %v2353
      %v2355 = vmul.f32 %v1653, %v2228
      %v2356 = vmul.f32 %v1658, %v2230
      %v2357 = vmul.f32 %v1663, %v2232
      %v2358 = vmul.f32 %v1668, %v2234
      %v2359 = vmul.f32 %v1673, %v2236
      %v2360 = vmul.f32 %v1678, %v2238
      %v2361 = vmul.f32 %v1683, %v2240
      %v2362 = vmul.f32 %v1688, %v2242
      %v2363 = vmul.f32 %v1693, %v2244
      %v2364 = vmul.f32 %v1698, %v2246
      %v2365 = vmul.f32 %v1703, %v2248
      %v2366 = vmul.f32 %v1708, %v2250
      %v2367 = vmul.f32 %v1713, %v2252
      %v2368 = vmul.f32 %v1718, %v2254
      %v2369 = vmul.f32 %v1723, %v2256
      %v2370 = vmul.f32 %v1728, %v2258
      %v2371 = vmul.f32 %v1733, %v2260
      %v2372 = vmul.f32 %v1738, %v2262
      %v2373 = vmul.f32 %v1743, %v2264
      %v2374 = vmul.f32 %v1748, %v2266
      %v2375 = vmul.f32 %v1753, %v2268
      %v2376 = vmul.f32 %v1758, %v2270
      %v2377 = vmul.f32 %v1763, %v2272
      %v2378 = vmul.f32 %v1768, %v2274
      %v2379 = vmul.f32 %v1773, %v2276
      %v2380 = vmul.f32 %v1778, %v2278
      %v2381 = vmul.f32 %v1783, %v2280
      %v2382 = vmul.f32 %v1788, %v2282
      %v2383 = vmul.f32 %v1793, %v2284
      %v2384 = vmul.f32 %v1798, %v2286
      %v2385 = vmul.f32 %v1803, %v2288
      %v2386 = vmul.f32 %v1808, %v2290
      %v2387 = vmul.f32 %v1813, %v2292
      %v2388 = vmul.f32 %v1818, %v2294
      %v2389 = vmul.f32 %v1823, %v2296
      %v2390 = vmul.f32 %v1828, %v2298
      %v2391 = vmul.f32 %v1833, %v2300
      %v2392 = vmul.f32 %v1838, %v2302
      %v2393 = vmul.f32 %v1843, %v2304
      %v2394 = vmul.f32 %v1848, %v2306
      %v2395 = vmul.f32 %v1853, %v2308
      %v2396 = vmul.f32 %v1858, %v2310
      %v2397 = vmul.f32 %v1863, %v2312
      %v2398 = vmul.f32 %v1868, %v2314
      %v2399 = vmul.f32 %v1873, %v2316
      %v2400 = vmul.f32 %v1878, %v2318
      %v2401 = vmul.f32 %v1883, %v2320
      %v2402 = vmul.f32 %v1888, %v2322
      %v2403 = vmul.f32 %v1893, %v2324
      %v2404 = vmul.f32 %v1898, %v2326
      %v2405 = vmul.f32 %v1903, %v2328
      %v2406 = vmul.f32 %v1908, %v2330
      %v2407 = vmul.f32 %v1913, %v2332
      %v2408 = vmul.f32 %v1918, %v2334
      %v2409 = vmul.f32 %v1923, %v2336
      %v2410 = vmul.f32 %v1928, %v2338
      %v2411 = vmul.f32 %v1933, %v2340
      %v2412 = vmul.f32 %v1938, %v2342
      %v2413 = vmul.f32 %v1943, %v2344
      %v2414 = vmul.f32 %v1948, %v2346
      %v2415 = vmul.f32 %v1953, %v2348
      %v2416 = vmul.f32 %v1958, %v2350
      %v2417 = vmul.f32 %v1963, %v2352
      %v2418 = vmul.f32 %v1968, %v2354
      %v2419 = vld [vmem:[%s5] sm:$0xff]
      %v2420 = vld [vmem:[%s5 + $0x8] sm:$0xff]
      %v2421 = vld [vmem:[%s6] sm:$0x1]
      %v2423 = vlaneseq
      %v2424 = vshrl.u32 %v2423, 7
      %v2425 = vsub.s32 0, %v2424
      %v2426 = vrot.slane %v2421, %v2425
      %vm2428 = vcmask 130048
      %v2430 = vsel %vm2428, %v2355, 0
      %v2433 = vsel %vm2428, %v2356, 0
      %v2436 = vsel %vm2428, %v2357, 0
      %v2439 = vsel %vm2428, %v2358, 0
      %v2442 = vsel %vm2428, %v2359, 0
      %v2445 = vsel %vm2428, %v2360, 0
      %v2448 = vsel %vm2428, %v2361, 0
      %v2451 = vsel %vm2428, %v2362, 0
      %v2454 = vsel %vm2428, %v2363, 0
      %v2457 = vsel %vm2428, %v2364, 0
      %v2460 = vsel %vm2428, %v2365, 0
      %v2463 = vsel %vm2428, %v2366, 0
      %v2466 = vsel %vm2428, %v2367, 0
      %v2469 = vsel %vm2428, %v2368, 0
      %v2472 = vsel %vm2428, %v2369, 0
      %v2475 = vsel %vm2428, %v2370, 0
      %v2478 = vsel %vm2428, %v2371, 0
      %v2481 = vsel %vm2428, %v2372, 0
      %v2484 = vsel %vm2428, %v2373, 0
      %v2487 = vsel %vm2428, %v2374, 0
      %v2490 = vsel %vm2428, %v2375, 0
      %v2493 = vsel %vm2428, %v2376, 0
      %v2496 = vsel %vm2428, %v2377, 0
      %v2499 = vsel %vm2428, %v2378, 0
      %v2502 = vsel %vm2428, %v2379, 0
      %v2505 = vsel %vm2428, %v2380, 0
      %v2508 = vsel %vm2428, %v2381, 0
      %v2511 = vsel %vm2428, %v2382, 0
      %v2514 = vsel %vm2428, %v2383, 0
      %v2517 = vsel %vm2428, %v2384, 0
      %v2520 = vsel %vm2428, %v2385, 0
      %v2523 = vsel %vm2428, %v2386, 0
      %v2526 = vsel %vm2428, %v2387, 0
      %v2529 = vsel %vm2428, %v2388, 0
      %v2532 = vsel %vm2428, %v2389, 0
      %v2535 = vsel %vm2428, %v2390, 0
      %v2538 = vsel %vm2428, %v2391, 0
      %v2541 = vsel %vm2428, %v2392, 0
      %v2544 = vsel %vm2428, %v2393, 0
      %v2547 = vsel %vm2428, %v2394, 0
      %v2550 = vsel %vm2428, %v2395, 0
      %v2553 = vsel %vm2428, %v2396, 0
      %v2556 = vsel %vm2428, %v2397, 0
      %v2559 = vsel %vm2428, %v2398, 0
      %v2562 = vsel %vm2428, %v2399, 0
      %v2565 = vsel %vm2428, %v2400, 0
      %v2568 = vsel %vm2428, %v2401, 0
      %v2571 = vsel %vm2428, %v2402, 0
      %v2574 = vsel %vm2428, %v2403, 0
      %v2577 = vsel %vm2428, %v2404, 0
      %v2580 = vsel %vm2428, %v2405, 0
      %v2583 = vsel %vm2428, %v2406, 0
      %v2586 = vsel %vm2428, %v2407, 0
      %v2589 = vsel %vm2428, %v2408, 0
      %v2592 = vsel %vm2428, %v2409, 0
      %v2595 = vsel %vm2428, %v2410, 0
      %v2598 = vsel %vm2428, %v2411, 0
      %v2601 = vsel %vm2428, %v2412, 0
      %v2604 = vsel %vm2428, %v2413, 0
      %v2607 = vsel %vm2428, %v2414, 0
      %v2610 = vsel %vm2428, %v2415, 0
      %v2613 = vsel %vm2428, %v2416, 0
      %v2616 = vsel %vm2428, %v2417, 0
      %v2619 = vsel %vm2428, %v2418, 0
      %2621 = vmatprep.subr.mxu0 0.0
      %2622 = vmatpush1.msra.mxu0 0.0
      %2623 = vmatprep.subr.mxu0 0.0
      %2624 = vmatpush1.msra.mxu0 0.0
      %2625 = vmatprep.subr.mxu0 0.0
      %2626 = vmatpush1.msra.mxu0 0.0
      %2627 = vmatprep.subr.mxu0 0.0
      %2628 = vmatpush1.msra.mxu0 0.0
      %2629 = vmatprep.subr.mxu0 0.0
      %2630 = vmatpush1.msra.mxu0 0.0
      %2631 = vmatprep.subr.mxu0 0.0
      %2632 = vmatpush1.msra.mxu0 0.0
      %2633 = vmatprep.subr.mxu0 0.0
      %2634 = vmatpush1.msra.mxu0 0.0
      %2635 = vmatprep.subr.mxu0 0.0
      %2636 = vmatpush1.msra.mxu0 0.0
      %2637 = vmatprep.subr.mxu0 0.0
      %2638 = vmatpush1.msra.mxu0 0.0
      %2639 = vmatprep.subr.mxu0 0.0
      %2640 = vmatpush1.msra.mxu0 0.0
      %2641 = vmatprep.subr.mxu0 0.0
      %2642 = vmatpush1.msra.mxu0 0.0
      %2643 = vmatprep.subr.mxu0 0.0
      %2644 = vmatpush1.msra.mxu0 0.0
      %2645 = vmatprep.subr.mxu0 0.0
      %2646 = vmatpush1.msra.mxu0 0.0
      %2647 = vmatprep.subr.mxu0 0.0
      %2648 = vmatpush1.msra.mxu0 0.0
      %2649 = vmatprep.subr.mxu0 0.0
      %2650 = vmatpush1.msra.mxu0 %v2420
      %2651 = vmatprep.subr.mxu0 0.0
      %2652 = vmatpush1.msra.mxu0 %v2419
      %2653 = vmatprep.subr.mxu0 0.0
      %2654 = vmatpush2.msra.mxu0 0.0
      %2655 = vmatprep.subr.mxu0 0.0
      %2656 = vmatpush2.msra.mxu0 0.0
      %2657 = vmatprep.subr.mxu0 0.0
      %2658 = vmatpush2.msra.mxu0 0.0
      %2659 = vmatprep.subr.mxu0 0.0
      %2660 = vmatpush2.msra.mxu0 0.0
      %2661 = vmatprep.subr.mxu0 0.0
      %2662 = vmatpush2.msra.mxu0 0.0
      %2663 = vmatprep.subr.mxu0 0.0
      %2664 = vmatpush2.msra.mxu0 0.0
      %2665 = vmatprep.subr.mxu0 0.0
      %2666 = vmatpush2.msra.mxu0 0.0
      %2667 = vmatprep.subr.mxu0 0.0
      %2668 = vmatpush2.msra.mxu0 0.0
      %2669 = vmatprep.subr.mxu0 0.0
      %2670 = vmatpush2.msra.mxu0 0.0
      %2671 = vmatprep.subr.mxu0 0.0
      %2672 = vmatpush2.msra.mxu0 0.0
      %2673 = vmatprep.subr.mxu0 0.0
      %2674 = vmatpush2.msra.mxu0 0.0
      %2675 = vmatprep.subr.mxu0 0.0
      %2676 = vmatpush2.msra.mxu0 0.0
      %2677 = vmatprep.subr.mxu0 0.0
      %2678 = vmatpush2.msra.mxu0 0.0
      %2679 = vmatprep.subr.mxu0 0.0
      %2680 = vmatpush2.msra.mxu0 0.0
      %2681 = vmatprep.subr.mxu0 0.0
      %2682 = vmatpush2.msra.mxu0 0.0
      %2683 = vmatprep.subr.mxu0 0.0
      %2684 = vmatpush2.msra.mxu0 0.0
      %2685 = vmatprep.mubr.f32.mxu0 0.0
      %2686 = vmatmul.mubr.f32.gmra.mxu0 %v2430
      %v2687 = vpop.f32.mrf.mxu0
      %v2688 = vadd.f32 %v2426, %v2687
      %v2689 = vpop.f32.mrf.mxu0
      %2690 = vmatprep.mubr.f32.mxu0 0.0
      %2691 = vmatmul.mubr.f32.gmra.mxu0 %v2433
      %v2692 = vpop.f32.mrf.mxu0
      %v2693 = vadd.f32 %v2426, %v2692
      %v2694 = vpop.f32.mrf.mxu0
      %2695 = vmatprep.mubr.f32.mxu0 0.0
      %2696 = vmatmul.mubr.f32.gmra.mxu0 %v2436
      %v2697 = vpop.f32.mrf.mxu0
      %v2698 = vadd.f32 %v2426, %v2697
      %v2699 = vpop.f32.mrf.mxu0
      %2700 = vmatprep.mubr.f32.mxu0 0.0
      %2701 = vmatmul.mubr.f32.gmra.mxu0 %v2439
      %v2702 = vpop.f32.mrf.mxu0
      %v2703 = vadd.f32 %v2426, %v2702
      %v2704 = vpop.f32.mrf.mxu0
      %2705 = vmatprep.mubr.f32.mxu0 0.0
      %2706 = vmatmul.mubr.f32.gmra.mxu0 %v2442
      %v2707 = vpop.f32.mrf.mxu0
      %v2708 = vadd.f32 %v2426, %v2707
      %v2709 = vpop.f32.mrf.mxu0
      %2710 = vmatprep.mubr.f32.mxu0 0.0
      %2711 = vmatmul.mubr.f32.gmra.mxu0 %v2445
      %v2712 = vpop.f32.mrf.mxu0
      %v2713 = vadd.f32 %v2426, %v2712
      %v2714 = vpop.f32.mrf.mxu0
      %2715 = vmatprep.mubr.f32.mxu0 0.0
      %2716 = vmatmul.mubr.f32.gmra.mxu0 %v2448
      %v2717 = vpop.f32.mrf.mxu0
      %v2718 = vadd.f32 %v2426, %v2717
      %v2719 = vpop.f32.mrf.mxu0
      %2720 = vmatprep.mubr.f32.mxu0 0.0
      %2721 = vmatmul.mubr.f32.gmra.mxu0 %v2451
      %v2722 = vpop.f32.mrf.mxu0
      %v2723 = vadd.f32 %v2426, %v2722
      %v2724 = vpop.f32.mrf.mxu0
      %2725 = vmatprep.mubr.f32.mxu0 0.0
      %2726 = vmatmul.mubr.f32.gmra.mxu0 %v2454
      %v2727 = vpop.f32.mrf.mxu0
      %v2728 = vadd.f32 %v2426, %v2727
      %v2729 = vpop.f32.mrf.mxu0
      %2730 = vmatprep.mubr.f32.mxu0 0.0
      %2731 = vmatmul.mubr.f32.gmra.mxu0 %v2457
      %v2732 = vpop.f32.mrf.mxu0
      %v2733 = vadd.f32 %v2426, %v2732
      %v2734 = vpop.f32.mrf.mxu0
      %2735 = vmatprep.mubr.f32.mxu0 0.0
      %2736 = vmatmul.mubr.f32.gmra.mxu0 %v2460
      %v2737 = vpop.f32.mrf.mxu0
      %v2738 = vadd.f32 %v2426, %v2737
      %v2739 = vpop.f32.mrf.mxu0
      %2740 = vmatprep.mubr.f32.mxu0 0.0
      %2741 = vmatmul.mubr.f32.gmra.mxu0 %v2463
      %v2742 = vpop.f32.mrf.mxu0
      %v2743 = vadd.f32 %v2426, %v2742
      %v2744 = vpop.f32.mrf.mxu0
      %2745 = vmatprep.mubr.f32.mxu0 0.0
      %2746 = vmatmul.mubr.f32.gmra.mxu0 %v2466
      %v2747 = vpop.f32.mrf.mxu0
      %v2748 = vadd.f32 %v2426, %v2747
      %v2749 = vpop.f32.mrf.mxu0
      %2750 = vmatprep.mubr.f32.mxu0 0.0
      %2751 = vmatmul.mubr.f32.gmra.mxu0 %v2469
      %v2752 = vpop.f32.mrf.mxu0
      %v2753 = vadd.f32 %v2426, %v2752
      %v2754 = vpop.f32.mrf.mxu0
      %2755 = vmatprep.mubr.f32.mxu0 0.0
      %2756 = vmatmul.mubr.f32.gmra.mxu0 %v2472
      %v2757 = vpop.f32.mrf.mxu0
      %v2758 = vadd.f32 %v2426, %v2757
      %v2759 = vpop.f32.mrf.mxu0
      %2760 = vmatprep.mubr.f32.mxu0 0.0
      %2761 = vmatmul.mubr.f32.gmra.mxu0 %v2475
      %v2762 = vpop.f32.mrf.mxu0
      %v2763 = vadd.f32 %v2426, %v2762
      %v2764 = vpop.f32.mrf.mxu0
      %2765 = vmatprep.mubr.f32.mxu0 0.0
      %2766 = vmatmul.mubr.f32.gmra.mxu0 %v2478
      %v2767 = vpop.f32.mrf.mxu0
      %v2768 = vadd.f32 %v2426, %v2767
      %v2769 = vpop.f32.mrf.mxu0
      %2770 = vmatprep.mubr.f32.mxu0 0.0
      %2771 = vmatmul.mubr.f32.gmra.mxu0 %v2481
      %v2772 = vpop.f32.mrf.mxu0
      %v2773 = vadd.f32 %v2426, %v2772
      %v2774 = vpop.f32.mrf.mxu0
      %2775 = vmatprep.mubr.f32.mxu0 0.0
      %2776 = vmatmul.mubr.f32.gmra.mxu0 %v2484
      %v2777 = vpop.f32.mrf.mxu0
      %v2778 = vadd.f32 %v2426, %v2777
      %v2779 = vpop.f32.mrf.mxu0
      %2780 = vmatprep.mubr.f32.mxu0 0.0
      %2781 = vmatmul.mubr.f32.gmra.mxu0 %v2487
      %v2782 = vpop.f32.mrf.mxu0
      %v2783 = vadd.f32 %v2426, %v2782
      %v2784 = vpop.f32.mrf.mxu0
      %2785 = vmatprep.mubr.f32.mxu0 0.0
      %2786 = vmatmul.mubr.f32.gmra.mxu0 %v2490
      %v2787 = vpop.f32.mrf.mxu0
      %v2788 = vadd.f32 %v2426, %v2787
      %v2789 = vpop.f32.mrf.mxu0
      %2790 = vmatprep.mubr.f32.mxu0 0.0
      %2791 = vmatmul.mubr.f32.gmra.mxu0 %v2493
      %v2792 = vpop.f32.mrf.mxu0
      %v2793 = vadd.f32 %v2426, %v2792
      %v2794 = vpop.f32.mrf.mxu0
      %2795 = vmatprep.mubr.f32.mxu0 0.0
      %2796 = vmatmul.mubr.f32.gmra.mxu0 %v2496
      %v2797 = vpop.f32.mrf.mxu0
      %v2798 = vadd.f32 %v2426, %v2797
      %v2799 = vpop.f32.mrf.mxu0
      %2800 = vmatprep.mubr.f32.mxu0 0.0
      %2801 = vmatmul.mubr.f32.gmra.mxu0 %v2499
      %v2802 = vpop.f32.mrf.mxu0
      %v2803 = vadd.f32 %v2426, %v2802
      %v2804 = vpop.f32.mrf.mxu0
      %2805 = vmatprep.mubr.f32.mxu0 0.0
      %2806 = vmatmul.mubr.f32.gmra.mxu0 %v2502
      %v2807 = vpop.f32.mrf.mxu0
      %v2808 = vadd.f32 %v2426, %v2807
      %v2809 = vpop.f32.mrf.mxu0
      %2810 = vmatprep.mubr.f32.mxu0 0.0
      %2811 = vmatmul.mubr.f32.gmra.mxu0 %v2505
      %v2812 = vpop.f32.mrf.mxu0
      %v2813 = vadd.f32 %v2426, %v2812
      %v2814 = vpop.f32.mrf.mxu0
      %2815 = vmatprep.mubr.f32.mxu0 0.0
      %2816 = vmatmul.mubr.f32.gmra.mxu0 %v2508
      %v2817 = vpop.f32.mrf.mxu0
      %v2818 = vadd.f32 %v2426, %v2817
      %v2819 = vpop.f32.mrf.mxu0
      %2820 = vmatprep.mubr.f32.mxu0 0.0
      %2821 = vmatmul.mubr.f32.gmra.mxu0 %v2511
      %v2822 = vpop.f32.mrf.mxu0
      %v2823 = vadd.f32 %v2426, %v2822
      %v2824 = vpop.f32.mrf.mxu0
      %2825 = vmatprep.mubr.f32.mxu0 0.0
      %2826 = vmatmul.mubr.f32.gmra.mxu0 %v2514
      %v2827 = vpop.f32.mrf.mxu0
      %v2828 = vadd.f32 %v2426, %v2827
      %v2829 = vpop.f32.mrf.mxu0
      %2830 = vmatprep.mubr.f32.mxu0 0.0
      %2831 = vmatmul.mubr.f32.gmra.mxu0 %v2517
      %v2832 = vpop.f32.mrf.mxu0
      %v2833 = vadd.f32 %v2426, %v2832
      %v2834 = vpop.f32.mrf.mxu0
      %2835 = vmatprep.mubr.f32.mxu0 0.0
      %2836 = vmatmul.mubr.f32.gmra.mxu0 %v2520
      %v2837 = vpop.f32.mrf.mxu0
      %v2838 = vadd.f32 %v2426, %v2837
      %v2839 = vpop.f32.mrf.mxu0
      %2840 = vmatprep.mubr.f32.mxu0 0.0
      %2841 = vmatmul.mubr.f32.gmra.mxu0 %v2523
      %v2842 = vpop.f32.mrf.mxu0
      %v2843 = vadd.f32 %v2426, %v2842
      %v2844 = vpop.f32.mrf.mxu0
      %2845 = vmatprep.mubr.f32.mxu0 0.0
      %2846 = vmatmul.mubr.f32.gmra.mxu0 %v2526
      %v2847 = vpop.f32.mrf.mxu0
      %v2848 = vadd.f32 %v2426, %v2847
      %v2849 = vpop.f32.mrf.mxu0
      %2850 = vmatprep.mubr.f32.mxu0 0.0
      %2851 = vmatmul.mubr.f32.gmra.mxu0 %v2529
      %v2852 = vpop.f32.mrf.mxu0
      %v2853 = vadd.f32 %v2426, %v2852
      %v2854 = vpop.f32.mrf.mxu0
      %2855 = vmatprep.mubr.f32.mxu0 0.0
      %2856 = vmatmul.mubr.f32.gmra.mxu0 %v2532
      %v2857 = vpop.f32.mrf.mxu0
      %v2858 = vadd.f32 %v2426, %v2857
      %v2859 = vpop.f32.mrf.mxu0
      %2860 = vmatprep.mubr.f32.mxu0 0.0
      %2861 = vmatmul.mubr.f32.gmra.mxu0 %v2535
      %v2862 = vpop.f32.mrf.mxu0
      %v2863 = vadd.f32 %v2426, %v2862
      %v2864 = vpop.f32.mrf.mxu0
      %2865 = vmatprep.mubr.f32.mxu0 0.0
      %2866 = vmatmul.mubr.f32.gmra.mxu0 %v2538
      %v2867 = vpop.f32.mrf.mxu0
      %v2868 = vadd.f32 %v2426, %v2867
      %v2869 = vpop.f32.mrf.mxu0
      %2870 = vmatprep.mubr.f32.mxu0 0.0
      %2871 = vmatmul.mubr.f32.gmra.mxu0 %v2541
      %v2872 = vpop.f32.mrf.mxu0
      %v2873 = vadd.f32 %v2426, %v2872
      %v2874 = vpop.f32.mrf.mxu0
      %2875 = vmatprep.mubr.f32.mxu0 0.0
      %2876 = vmatmul.mubr.f32.gmra.mxu0 %v2544
      %v2877 = vpop.f32.mrf.mxu0
      %v2878 = vadd.f32 %v2426, %v2877
      %v2879 = vpop.f32.mrf.mxu0
      %2880 = vmatprep.mubr.f32.mxu0 0.0
      %2881 = vmatmul.mubr.f32.gmra.mxu0 %v2547
      %v2882 = vpop.f32.mrf.mxu0
      %v2883 = vadd.f32 %v2426, %v2882
      %v2884 = vpop.f32.mrf.mxu0
      %2885 = vmatprep.mubr.f32.mxu0 0.0
      %2886 = vmatmul.mubr.f32.gmra.mxu0 %v2550
      %v2887 = vpop.f32.mrf.mxu0
      %v2888 = vadd.f32 %v2426, %v2887
      %v2889 = vpop.f32.mrf.mxu0
      %2890 = vmatprep.mubr.f32.mxu0 0.0
      %2891 = vmatmul.mubr.f32.gmra.mxu0 %v2553
      %v2892 = vpop.f32.mrf.mxu0
      %v2893 = vadd.f32 %v2426, %v2892
      %v2894 = vpop.f32.mrf.mxu0
      %2895 = vmatprep.mubr.f32.mxu0 0.0
      %2896 = vmatmul.mubr.f32.gmra.mxu0 %v2556
      %v2897 = vpop.f32.mrf.mxu0
      %v2898 = vadd.f32 %v2426, %v2897
      %v2899 = vpop.f32.mrf.mxu0
      %2900 = vmatprep.mubr.f32.mxu0 0.0
      %2901 = vmatmul.mubr.f32.gmra.mxu0 %v2559
      %v2902 = vpop.f32.mrf.mxu0
      %v2903 = vadd.f32 %v2426, %v2902
      %v2904 = vpop.f32.mrf.mxu0
      %2905 = vmatprep.mubr.f32.mxu0 0.0
      %2906 = vmatmul.mubr.f32.gmra.mxu0 %v2562
      %v2907 = vpop.f32.mrf.mxu0
      %v2908 = vadd.f32 %v2426, %v2907
      %v2909 = vpop.f32.mrf.mxu0
      %2910 = vmatprep.mubr.f32.mxu0 0.0
      %2911 = vmatmul.mubr.f32.gmra.mxu0 %v2565
      %v2912 = vpop.f32.mrf.mxu0
      %v2913 = vadd.f32 %v2426, %v2912
      %v2914 = vpop.f32.mrf.mxu0
      %2915 = vmatprep.mubr.f32.mxu0 0.0
      %2916 = vmatmul.mubr.f32.gmra.mxu0 %v2568
      %v2917 = vpop.f32.mrf.mxu0
      %v2918 = vadd.f32 %v2426, %v2917
      %v2919 = vpop.f32.mrf.mxu0
      %2920 = vmatprep.mubr.f32.mxu0 0.0
      %2921 = vmatmul.mubr.f32.gmra.mxu0 %v2571
      %v2922 = vpop.f32.mrf.mxu0
      %v2923 = vadd.f32 %v2426, %v2922
      %v2924 = vpop.f32.mrf.mxu0
      %2925 = vmatprep.mubr.f32.mxu0 0.0
      %2926 = vmatmul.mubr.f32.gmra.mxu0 %v2574
      %v2927 = vpop.f32.mrf.mxu0
      %v2928 = vadd.f32 %v2426, %v2927
      %v2929 = vpop.f32.mrf.mxu0
      %2930 = vmatprep.mubr.f32.mxu0 0.0
      %2931 = vmatmul.mubr.f32.gmra.mxu0 %v2577
      %v2932 = vpop.f32.mrf.mxu0
      %v2933 = vadd.f32 %v2426, %v2932
      %v2934 = vpop.f32.mrf.mxu0
      %2935 = vmatprep.mubr.f32.mxu0 0.0
      %2936 = vmatmul.mubr.f32.gmra.mxu0 %v2580
      %v2937 = vpop.f32.mrf.mxu0
      %v2938 = vadd.f32 %v2426, %v2937
      %v2939 = vpop.f32.mrf.mxu0
      %2940 = vmatprep.mubr.f32.mxu0 0.0
      %2941 = vmatmul.mubr.f32.gmra.mxu0 %v2583
      %v2942 = vpop.f32.mrf.mxu0
      %v2943 = vadd.f32 %v2426, %v2942
      %v2944 = vpop.f32.mrf.mxu0
      %2945 = vmatprep.mubr.f32.mxu0 0.0
      %2946 = vmatmul.mubr.f32.gmra.mxu0 %v2586
      %v2947 = vpop.f32.mrf.mxu0
      %v2948 = vadd.f32 %v2426, %v2947
      %v2949 = vpop.f32.mrf.mxu0
      %2950 = vmatprep.mubr.f32.mxu0 0.0
      %2951 = vmatmul.mubr.f32.gmra.mxu0 %v2589
      %v2952 = vpop.f32.mrf.mxu0
      %v2953 = vadd.f32 %v2426, %v2952
      %v2954 = vpop.f32.mrf.mxu0
      %2955 = vmatprep.mubr.f32.mxu0 0.0
      %2956 = vmatmul.mubr.f32.gmra.mxu0 %v2592
      %v2957 = vpop.f32.mrf.mxu0
      %v2958 = vadd.f32 %v2426, %v2957
      %v2959 = vpop.f32.mrf.mxu0
      %2960 = vmatprep.mubr.f32.mxu0 0.0
      %2961 = vmatmul.mubr.f32.gmra.mxu0 %v2595
      %v2962 = vpop.f32.mrf.mxu0
      %v2963 = vadd.f32 %v2426, %v2962
      %v2964 = vpop.f32.mrf.mxu0
      %2965 = vmatprep.mubr.f32.mxu0 0.0
      %2966 = vmatmul.mubr.f32.gmra.mxu0 %v2598
      %v2967 = vpop.f32.mrf.mxu0
      %v2968 = vadd.f32 %v2426, %v2967
      %v2969 = vpop.f32.mrf.mxu0
      %2970 = vmatprep.mubr.f32.mxu0 0.0
      %2971 = vmatmul.mubr.f32.gmra.mxu0 %v2601
      %v2972 = vpop.f32.mrf.mxu0
      %v2973 = vadd.f32 %v2426, %v2972
      %v2974 = vpop.f32.mrf.mxu0
      %2975 = vmatprep.mubr.f32.mxu0 0.0
      %2976 = vmatmul.mubr.f32.gmra.mxu0 %v2604
      %v2977 = vpop.f32.mrf.mxu0
      %v2978 = vadd.f32 %v2426, %v2977
      %v2979 = vpop.f32.mrf.mxu0
      %2980 = vmatprep.mubr.f32.mxu0 0.0
      %2981 = vmatmul.mubr.f32.gmra.mxu0 %v2607
      %v2982 = vpop.f32.mrf.mxu0
      %v2983 = vadd.f32 %v2426, %v2982
      %v2984 = vpop.f32.mrf.mxu0
      %2985 = vmatprep.mubr.f32.mxu0 0.0
      %2986 = vmatmul.mubr.f32.gmra.mxu0 %v2610
      %v2987 = vpop.f32.mrf.mxu0
      %v2988 = vadd.f32 %v2426, %v2987
      %v2989 = vpop.f32.mrf.mxu0
      %2990 = vmatprep.mubr.f32.mxu0 0.0
      %2991 = vmatmul.mubr.f32.gmra.mxu0 %v2613
      %v2992 = vpop.f32.mrf.mxu0
      %v2993 = vadd.f32 %v2426, %v2992
      %v2994 = vpop.f32.mrf.mxu0
      %2995 = vmatprep.mubr.f32.mxu0 0.0
      %2996 = vmatmul.mubr.f32.gmra.mxu0 %v2616
      %v2997 = vpop.f32.mrf.mxu0
      %v2998 = vadd.f32 %v2426, %v2997
      %v2999 = vpop.f32.mrf.mxu0
      %3000 = vmatprep.mubr.f32.mxu0 0.0
      %3001 = vmatmul.mubr.f32.gmra.mxu0 %v2619
      %v3002 = vpop.f32.mrf.mxu0
      %v3003 = vadd.f32 %v2426, %v3002
      %v3004 = vpop.f32.mrf.mxu0
      %3005 = vdwg.mxu0
      %vm3006 = vcmask 64512
      %3007 = vst.msk [vmem:[%s280] sm:$0xff] %vm3006, %v2688
      %3008 = vst.msk [vmem:[%s280 + $0x8] sm:$0xff] %vm3006, %v2693
      %3009 = vst.msk [vmem:[%s280 + $0x10] sm:$0xff] %vm3006, %v2698
      %3010 = vst.msk [vmem:[%s280 + $0x18] sm:$0xff] %vm3006, %v2703
      %3011 = vst.msk [vmem:[%s280 + $0x20] sm:$0xff] %vm3006, %v2708
      %3012 = vst.msk [vmem:[%s280 + $0x28] sm:$0xff] %vm3006, %v2713
      %3013 = vst.msk [vmem:[%s280 + $0x30] sm:$0xff] %vm3006, %v2718
      %3014 = vst.msk [vmem:[%s280 + $0x38] sm:$0xff] %vm3006, %v2723
      %3015 = vst.msk [vmem:[%s280 + $0x40] sm:$0xff] %vm3006, %v2728
      %3016 = vst.msk [vmem:[%s280 + $0x48] sm:$0xff] %vm3006, %v2733
      %3017 = vst.msk [vmem:[%s280 + $0x50] sm:$0xff] %vm3006, %v2738
      %3018 = vst.msk [vmem:[%s280 + $0x58] sm:$0xff] %vm3006, %v2743
      %3019 = vst.msk [vmem:[%s280 + $0x60] sm:$0xff] %vm3006, %v2748
      %3020 = vst.msk [vmem:[%s280 + $0x68] sm:$0xff] %vm3006, %v2753
      %3021 = vst.msk [vmem:[%s280 + $0x70] sm:$0xff] %vm3006, %v2758
      %3022 = vst.msk [vmem:[%s280 + $0x78] sm:$0xff] %vm3006, %v2763
      %3023 = vst.msk [vmem:[%s280 + $0x80] sm:$0xff] %vm3006, %v2768
      %3024 = vst.msk [vmem:[%s280 + $0x88] sm:$0xff] %vm3006, %v2773
      %3025 = vst.msk [vmem:[%s280 + $0x90] sm:$0xff] %vm3006, %v2778
      %3026 = vst.msk [vmem:[%s280 + $0x98] sm:$0xff] %vm3006, %v2783
      %3027 = vst.msk [vmem:[%s280 + $0xa0] sm:$0xff] %vm3006, %v2788
      %3028 = vst.msk [vmem:[%s280 + $0xa8] sm:$0xff] %vm3006, %v2793
      %3029 = vst.msk [vmem:[%s280 + $0xb0] sm:$0xff] %vm3006, %v2798
      %3030 = vst.msk [vmem:[%s280 + $0xb8] sm:$0xff] %vm3006, %v2803
      %3031 = vst.msk [vmem:[%s280 + $0xc0] sm:$0xff] %vm3006, %v2808
      %3032 = vst.msk [vmem:[%s280 + $0xc8] sm:$0xff] %vm3006, %v2813
      %3033 = vst.msk [vmem:[%s280 + $0xd0] sm:$0xff] %vm3006, %v2818
      %3034 = vst.msk [vmem:[%s280 + $0xd8] sm:$0xff] %vm3006, %v2823
      %3035 = vst.msk [vmem:[%s280 + $0xe0] sm:$0xff] %vm3006, %v2828
      %3036 = vst.msk [vmem:[%s280 + $0xe8] sm:$0xff] %vm3006, %v2833
      %3037 = vst.msk [vmem:[%s280 + $0xf0] sm:$0xff] %vm3006, %v2838
      %3038 = vst.msk [vmem:[%s280 + $0xf8] sm:$0xff] %vm3006, %v2843
      %3039 = vst.msk [vmem:[%s280 + $0x100] sm:$0xff] %vm3006, %v2848
      %3040 = vst.msk [vmem:[%s280 + $0x108] sm:$0xff] %vm3006, %v2853
      %3041 = vst.msk [vmem:[%s280 + $0x110] sm:$0xff] %vm3006, %v2858
      %3042 = vst.msk [vmem:[%s280 + $0x118] sm:$0xff] %vm3006, %v2863
      %3043 = vst.msk [vmem:[%s280 + $0x120] sm:$0xff] %vm3006, %v2868
      %3044 = vst.msk [vmem:[%s280 + $0x128] sm:$0xff] %vm3006, %v2873
      %3045 = vst.msk [vmem:[%s280 + $0x130] sm:$0xff] %vm3006, %v2878
      %3046 = vst.msk [vmem:[%s280 + $0x138] sm:$0xff] %vm3006, %v2883
      %3047 = vst.msk [vmem:[%s280 + $0x140] sm:$0xff] %vm3006, %v2888
      %3048 = vst.msk [vmem:[%s280 + $0x148] sm:$0xff] %vm3006, %v2893
      %3049 = vst.msk [vmem:[%s280 + $0x150] sm:$0xff] %vm3006, %v2898
      %3050 = vst.msk [vmem:[%s280 + $0x158] sm:$0xff] %vm3006, %v2903
      %3051 = vst.msk [vmem:[%s280 + $0x160] sm:$0xff] %vm3006, %v2908
      %3052 = vst.msk [vmem:[%s280 + $0x168] sm:$0xff] %vm3006, %v2913
      %3053 = vst.msk [vmem:[%s280 + $0x170] sm:$0xff] %vm3006, %v2918
      %3054 = vst.msk [vmem:[%s280 + $0x178] sm:$0xff] %vm3006, %v2923
      %3055 = vst.msk [vmem:[%s280 + $0x180] sm:$0xff] %vm3006, %v2928
      %3056 = vst.msk [vmem:[%s280 + $0x188] sm:$0xff] %vm3006, %v2933
      %3057 = vst.msk [vmem:[%s280 + $0x190] sm:$0xff] %vm3006, %v2938
      %3058 = vst.msk [vmem:[%s280 + $0x198] sm:$0xff] %vm3006, %v2943
      %3059 = vst.msk [vmem:[%s280 + $0x1a0] sm:$0xff] %vm3006, %v2948
      %3060 = vst.msk [vmem:[%s280 + $0x1a8] sm:$0xff] %vm3006, %v2953
      %3061 = vst.msk [vmem:[%s280 + $0x1b0] sm:$0xff] %vm3006, %v2958
      %3062 = vst.msk [vmem:[%s280 + $0x1b8] sm:$0xff] %vm3006, %v2963
      %3063 = vst.msk [vmem:[%s280 + $0x1c0] sm:$0xff] %vm3006, %v2968
      %3064 = vst.msk [vmem:[%s280 + $0x1c8] sm:$0xff] %vm3006, %v2973
      %3065 = vst.msk [vmem:[%s280 + $0x1d0] sm:$0xff] %vm3006, %v2978
      %3066 = vst.msk [vmem:[%s280 + $0x1d8] sm:$0xff] %vm3006, %v2983
      %3067 = vst.msk [vmem:[%s280 + $0x1e0] sm:$0xff] %vm3006, %v2988
      %3068 = vst.msk [vmem:[%s280 + $0x1e8] sm:$0xff] %vm3006, %v2993
      %3069 = vst.msk [vmem:[%s280 + $0x1f0] sm:$0xff] %vm3006, %v2998
      %3070 = vst.msk [vmem:[%s280 + $0x1f8] sm:$0xff] %vm3006, %v3003
      %s3071 = smul.u32 64, %s18
      %p3072 = scmp.lt.s32.totalorder %s3071, 127
      %s3073 = scalar_select %p3072, %s3071, 127
      %s3074 = smul.addr %s3073, 8
      %s3075 = scalar_lea.vmem %s7, %s3074
      // Predicated region
      $region49: #{_lambda_.1} parent=47 // pred_check
        %p3076 = pneg %p188
      $region50: #{_lambda_.1} parent=47 // pred_check_branch
        %3078 = sbr.rel (%p3076) target = $region52
      $region51: #{_lambda_.1} parent=47 // pred_region
        %s3079 = smul.u32 64, %s18
      $region52: #{_lambda_.1} parent=47 // pred_fallthru
        _
    $region48: #{_lambda_.1} parent=5 // pred_fallthru
      _
    %p3080 = scmp.le.s32.totalorder 2, %s13
    // Predicated region
    $region53: #{_lambda_.1} parent=5 // pred_check
      %p3081 = pneg %p3080
    $region54: #{_lambda_.1} parent=5 // pred_check_branch
      %3083 = sbr.rel (%p3081) target = $region56
    $region55: #{_lambda_.1} parent=5 // pred_region
      %s3084 = ssub.s32 %s13, 2
      // Predicated region
      $region57: #{_lambda_.1} parent=55 // pred_check
        %p3085 = pneg %p194
      $region58: #{_lambda_.1} parent=55 // pred_check_branch
        %3087 = sbr.rel (%p3085) target = $region60
      $region59: #{_lambda_.1} parent=55 // pred_region
        %s3088 = smul.u32 64, %s19
        %p3089 = scmp.lt.s32.totalorder %s3088, 127
        %s3090 = scalar_select %p3089, %s3088, 127
        %s3091 = smul.addr %s3090, 8
        %s3092 = scalar_lea.vmem %s7, %s3091
      $region60: #{_lambda_.1} parent=55 // pred_fallthru
        _
    $region56: #{_lambda_.1} parent=5 // pred_fallthru
      _
  $region6: #{_lambda_.1} parent=0 // loop_footer
    %s17 = sadd.s32 1, %s13
  $region7: #{_lambda_.1} parent=0 // loop_footer_branch
    %12 = sbr.rel target = $region3
  $region8: #{_lambda_.1} parent=0 // loop_exit
    _

</llo_original>
